<compile_context>
chip_gen: v7x
topology: tpu7x:2x2x1
jax: 0.10.0
libtpu: 0.0.40
codegen_flags: <defaults>
</compile_context>

<pallas_src>
import jax
import jax.numpy as jnp
from jax.experimental import pallas as pl
from jax.experimental.pallas import tpu as pltpu


def _dae_kernel(x_ref,
                w1_ref, b1_ref, w2_ref, b2_ref, w3_ref, b3_ref,
                w4_ref, b4_ref, w5_ref, b5_ref, w6_ref, b6_ref,
                enc_ref, dec_ref):
    def dense(h, w_ref, b_ref, relu=True):
        # bf16 x bf16 on the MXU, f32 accumulation; bias add + relu in f32 on the VPU.
        y = jnp.dot(h.astype(w_ref.dtype), w_ref[...],
                    preferred_element_type=jnp.float32) + b_ref[...]
        return jnp.maximum(y, 0.0) if relu else y

    x = x_ref[...]

    # encoder (dropout = identity in eval mode)
    h = dense(x, w1_ref, b1_ref)
    h = dense(h, w2_ref, b2_ref)
    enc = dense(h, w3_ref, b3_ref)            # lane-padded width (>=128), padded lanes are 0
    enc_ref[...] = enc.astype(enc_ref.dtype)  # lane-dense store

    # decoder
    h = dense(enc, w4_ref, b4_ref)            # W4 rows zero-padded to match enc padding
    h = dense(h, w5_ref, b5_ref)
    dec = dense(h, w6_ref, b6_ref, relu=False)
    dec_ref[...] = dec.astype(dec_ref.dtype)


def deep_autorec_forward(x, params, *, batch_tile=128, weights_dtype=jnp.bfloat16):
    """x: (B, input_dim) float32.  params: dict of transposed (in, out) weights and (1, out) biases."""
    B, input_dim = x.shape
    latent_dim = params["w3"].shape[1]
    assert B % batch_tile == 0, "batch must be a multiple of batch_tile"
    assert input_dim % 128 == 0, "input_dim must be lane-dense (multiple of 128)"

    # Pad the encoder output width to a multiple of 128 lanes (lane-dense stores).
    enc_pad = ((latent_dim + 127) // 128) * 128
    pad = enc_pad - latent_dim
    w3 = jnp.pad(params["w3"], ((0, 0), (0, pad)))
    b3 = jnp.pad(params["b3"], ((0, 0), (0, pad)))
    w4 = jnp.pad(params["w4"], ((0, pad), (0, 0)))

    weight_args = [
        params["w1"].astype(weights_dtype), params["b1"].astype(jnp.float32),
        params["w2"].astype(weights_dtype), params["b2"].astype(jnp.float32),
        w3.astype(weights_dtype),            b3.astype(jnp.float32),
        w4.astype(weights_dtype),            params["b4"].astype(jnp.float32),
        params["w5"].astype(weights_dtype), params["b5"].astype(jnp.float32),
        params["w6"].astype(weights_dtype), params["b6"].astype(jnp.float32),
    ]

    # Whole weight/bias arrays resident in VMEM every grid step (constant index_map
    # => no re-DMA across grid steps; total weight footprint here is < 0.2 MiB).
    def full_spec(arr):
        nd = arr.ndim
        return pl.BlockSpec(arr.shape, lambda i, _nd=nd: (0,) * _nd)

    in_specs = [pl.BlockSpec((batch_tile, input_dim), lambda i: (i, 0))]
    in_specs += [full_spec(a) for a in weight_args]

    out_specs = [
        pl.BlockSpec((batch_tile, enc_pad), lambda i: (i, 0)),
        pl.BlockSpec((batch_tile, input_dim), lambda i: (i, 0)),
    ]
    out_shape = (
        jax.ShapeDtypeStruct((B, enc_pad), jnp.float32),
        jax.ShapeDtypeStruct((B, input_dim), jnp.float32),
    )

    grid = (B // batch_tile,)

    # Scheduling hint for XLA around the custom call.
    layer_dims = [
        (input_dim, 4 * latent_dim), (4 * latent_dim, 2 * latent_dim),
        (2 * latent_dim, enc_pad), (enc_pad, 2 * latent_dim),
        (2 * latent_dim, 4 * latent_dim), (4 * latent_dim, input_dim),
    ]
    flops = 2 * B * sum(fi * fo for fi, fo in layer_dims)
    weight_bytes = sum(int(a.size) * a.dtype.itemsize for a in weight_args)
    bytes_accessed = (B * input_dim * 4) * 2 + B * enc_pad * 4 + weight_bytes
    cost = pl.CostEstimate(flops=flops, transcendentals=0,
                           bytes_accessed=bytes_accessed)

    fn = pl.pallas_call(
        _dae_kernel,
        out_shape=out_shape,
        grid_spec=pltpu.PrefetchScalarGridSpec(
            num_scalar_prefetch=0,
            grid=grid,
            in_specs=in_specs,
            out_specs=out_specs,
        ),
        compiler_params=pltpu.CompilerParams(
            dimension_semantics=("parallel",),
            # Explicit limit with headroom so large batch_tile sweeps stay safe on
            # v7x's 64 MiB physical VMEM (this tiny model needs only a few MiB).
            vmem_limit_bytes=48 * 1024 * 1024,
        ),
        cost_estimate=cost,
    )
    enc_padded, dec = fn(x, *weight_args)
    return enc_padded[:, :latent_dim], dec


def init_params(key, input_dim, latent_dim):
    """Deterministic init. PyTorch Linear weight is (out, in); we store the
    transpose (in, out) and bias as (1, out) for lane-major broadcast."""
    dims = [
        (input_dim, latent_dim * 4),     # encoder_dense1
        (latent_dim * 4, latent_dim * 2),
        (latent_dim * 2, latent_dim),
        (latent_dim, latent_dim * 2),    # decoder_dense1
        (latent_dim * 2, latent_dim * 4),
        (latent_dim * 4, input_dim),
    ]
    params = {}
    for idx, (fan_in, fan_out) in enumerate(dims, start=1):
        key, kw, kb = jax.random.split(key, 3)
        bound = 1.0 / jnp.sqrt(fan_in)   # PyTorch default uniform init bound
        params[f"w{idx}"] = jax.random.uniform(
            kw, (fan_in, fan_out), jnp.float32, -bound, bound)
        params[f"b{idx}"] = jax.random.uniform(
            kb, (1, fan_out), jnp.float32, -bound, bound)
    return params


def reference_forward(x, params, weights_dtype=jnp.bfloat16):
    """Pure-JAX reference with the same bf16-weight / f32-accumulate recipe."""
    def dense(h, w, b, relu=True):
        y = jnp.dot(h.astype(weights_dtype), w.astype(weights_dtype),
                    preferred_element_type=jnp.float32) + b
        return jnp.maximum(y, 0.0) if relu else y
    h = dense(x, params["w1"], params["b1"])
    h = dense(h, params["w2"], params["b2"])
    enc = dense(h, params["w3"], params["b3"])
    h = dense(enc, params["w4"], params["b4"])
    h = dense(h, params["w5"], params["b5"])
    dec = dense(h, params["w6"], params["b6"], relu=False)
    return enc, dec


if __name__ == "__main__":
    key = jax.random.PRNGKey(0)
    input_dim = 256
    latent_dim = 32
    batch = 512          # grid = 4 with batch_tile=128: pipelining + both v7x TCs
    batch_tile = 128

    kx, kp = jax.random.split(key)
    x = jax.random.normal(kx, (batch, input_dim), jnp.float32)
    params = init_params(kp, input_dim, latent_dim)

    enc, dec = deep_autorec_forward(x, params, batch_tile=batch_tile)
    enc = jax.block_until_ready(enc)
    dec = jax.block_until_ready(dec)

    enc_ref, dec_ref = reference_forward(x, params)
    assert enc.shape == (batch, latent_dim)
    assert dec.shape == (batch, input_dim)
    assert jnp.allclose(enc, enc_ref, atol=1e-2, rtol=1e-2)
    assert jnp.allclose(dec, dec_ref, atol=1e-2, rtol=1e-2)

    print("KERNEL_OK")
</pallas_src>

<mosaic_0001>
module attributes {stable_mosaic.version = 11 : i64} {
  func.func @_dae_kernel(%arg0: i32, %arg1: memref<128x256xf32, #tpu.memory_space<vmem>>, %arg2: memref<256x128xbf16, #tpu.memory_space<vmem>>, %arg3: memref<1x128xf32, #tpu.memory_space<vmem>>, %arg4: memref<128x64xbf16, #tpu.memory_space<vmem>>, %arg5: memref<1x64xf32, #tpu.memory_space<vmem>>, %arg6: memref<64x128xbf16, #tpu.memory_space<vmem>>, %arg7: memref<1x128xf32, #tpu.memory_space<vmem>>, %arg8: memref<128x64xbf16, #tpu.memory_space<vmem>>, %arg9: memref<1x64xf32, #tpu.memory_space<vmem>>, %arg10: memref<64x128xbf16, #tpu.memory_space<vmem>>, %arg11: memref<1x128xf32, #tpu.memory_space<vmem>>, %arg12: memref<128x256xbf16, #tpu.memory_space<vmem>>, %arg13: memref<1x256xf32, #tpu.memory_space<vmem>>, %arg14: memref<128x128xf32, #tpu.memory_space<vmem>>, %arg15: memref<128x256xf32, #tpu.memory_space<vmem>>) attributes {dimension_semantics = [#tpu.dimension_semantics<parallel>], iteration_bounds = array<i64: 4>, scalar_prefetch = 0 : i64, scratch_operands = 0 : i64, tpu.core_type = #tpu.core_type<tc>, window_params = [{transform_indices = @transform_0, window_bounds = array<i64: 128, 256>}, {pipeline_mode = #tpu.pipeline_mode<synchronous>, transform_indices = @transform_1, window_bounds = array<i64: 256, 128>}, {pipeline_mode = #tpu.pipeline_mode<synchronous>, transform_indices = @transform_2, window_bounds = array<i64: 1, 128>}, {pipeline_mode = #tpu.pipeline_mode<synchronous>, transform_indices = @transform_3, window_bounds = array<i64: 128, 64>}, {pipeline_mode = #tpu.pipeline_mode<synchronous>, transform_indices = @transform_4, window_bounds = array<i64: 1, 64>}, {pipeline_mode = #tpu.pipeline_mode<synchronous>, transform_indices = @transform_5, window_bounds = array<i64: 64, 128>}, {pipeline_mode = #tpu.pipeline_mode<synchronous>, transform_indices = @transform_6, window_bounds = array<i64: 1, 128>}, {pipeline_mode = #tpu.pipeline_mode<synchronous>, transform_indices = @transform_7, window_bounds = array<i64: 128, 64>}, {pipeline_mode = #tpu.pipeline_mode<synchronous>, transform_indices = @transform_8, window_bounds = array<i64: 1, 64>}, {pipeline_mode = #tpu.pipeline_mode<synchronous>, transform_indices = @transform_9, window_bounds = array<i64: 64, 128>}, {pipeline_mode = #tpu.pipeline_mode<synchronous>, transform_indices = @transform_10, window_bounds = array<i64: 1, 128>}, {pipeline_mode = #tpu.pipeline_mode<synchronous>, transform_indices = @transform_11, window_bounds = array<i64: 128, 256>}, {pipeline_mode = #tpu.pipeline_mode<synchronous>, transform_indices = @transform_12, window_bounds = array<i64: 1, 256>}, {transform_indices = @transform_13, window_bounds = array<i64: 128, 128>}, {transform_indices = @transform_14, window_bounds = array<i64: 128, 256>}]} {
    %c0 = arith.constant 0 : index
    %c0_0 = arith.constant 0 : index
    %0 = vector.load %arg1[%c0, %c0_0] : memref<128x256xf32, #tpu.memory_space<vmem>>, vector<128x256xf32>
    %1 = arith.truncf %0 : vector<128x256xf32> to vector<128x256xbf16>
    %c0_1 = arith.constant 0 : index
    %c0_2 = arith.constant 0 : index
    %2 = vector.load %arg2[%c0_1, %c0_2] : memref<256x128xbf16, #tpu.memory_space<vmem>>, vector<256x128xbf16>
    %cst = arith.constant dense<0.000000e+00> : vector<128x128xf32>
    %3 = tpu.matmul %1, %2, %cst {dimension_numbers = #tpu.dot_dimension_numbers<[1], [0], [0], [1], [0, 0, 1, 1], [], []>} : vector<128x256xbf16>, vector<256x128xbf16>, vector<128x128xf32> -> vector<128x128xf32>
    %c0_3 = arith.constant 0 : index
    %c0_4 = arith.constant 0 : index
    %4 = vector.load %arg3[%c0_3, %c0_4] : memref<1x128xf32, #tpu.memory_space<vmem>>, vector<1x128xf32>
    %5 = vector.broadcast %4 : vector<1x128xf32> to vector<128x128xf32>
    %6 = arith.addf %3, %5 : vector<128x128xf32>
    %cst_5 = arith.constant 0.000000e+00 : f32
    %7 = vector.broadcast %cst_5 : f32 to vector<128x128xf32>
    %8 = arith.maximumf %6, %7 : vector<128x128xf32>
    %9 = arith.truncf %8 : vector<128x128xf32> to vector<128x128xbf16>
    %c0_6 = arith.constant 0 : index
    %c0_7 = arith.constant 0 : index
    %10 = vector.load %arg4[%c0_6, %c0_7] : memref<128x64xbf16, #tpu.memory_space<vmem>>, vector<128x64xbf16>
    %cst_8 = arith.constant dense<0.000000e+00> : vector<128x64xf32>
    %11 = tpu.matmul %9, %10, %cst_8 {dimension_numbers = #tpu.dot_dimension_numbers<[1], [0], [0], [1], [0, 0, 1, 1], [], []>} : vector<128x128xbf16>, vector<128x64xbf16>, vector<128x64xf32> -> vector<128x64xf32>
    %c0_9 = arith.constant 0 : index
    %c0_10 = arith.constant 0 : index
    %12 = vector.load %arg5[%c0_9, %c0_10] : memref<1x64xf32, #tpu.memory_space<vmem>>, vector<1x64xf32>
    %13 = vector.broadcast %12 : vector<1x64xf32> to vector<128x64xf32>
    %14 = arith.addf %11, %13 : vector<128x64xf32>
    %cst_11 = arith.constant 0.000000e+00 : f32
    %15 = vector.broadcast %cst_11 : f32 to vector<128x64xf32>
    %16 = arith.maximumf %14, %15 : vector<128x64xf32>
    %17 = arith.truncf %16 : vector<128x64xf32> to vector<128x64xbf16>
    %c0_12 = arith.constant 0 : index
    %c0_13 = arith.constant 0 : index
    %18 = vector.load %arg6[%c0_12, %c0_13] : memref<64x128xbf16, #tpu.memory_space<vmem>>, vector<64x128xbf16>
    %cst_14 = arith.constant dense<0.000000e+00> : vector<128x128xf32>
    %19 = tpu.matmul %17, %18, %cst_14 {dimension_numbers = #tpu.dot_dimension_numbers<[1], [0], [0], [1], [0, 0, 1, 1], [], []>} : vector<128x64xbf16>, vector<64x128xbf16>, vector<128x128xf32> -> vector<128x128xf32>
    %c0_15 = arith.constant 0 : index
    %c0_16 = arith.constant 0 : index
    %20 = vector.load %arg7[%c0_15, %c0_16] : memref<1x128xf32, #tpu.memory_space<vmem>>, vector<1x128xf32>
    %21 = vector.broadcast %20 : vector<1x128xf32> to vector<128x128xf32>
    %22 = arith.addf %19, %21 : vector<128x128xf32>
    %cst_17 = arith.constant 0.000000e+00 : f32
    %23 = vector.broadcast %cst_17 : f32 to vector<128x128xf32>
    %24 = arith.maximumf %22, %23 : vector<128x128xf32>
    %c0_18 = arith.constant 0 : index
    %c0_19 = arith.constant 0 : index
    %25 = vector.load %arg14[%c0_18, %c0_19] : memref<128x128xf32, #tpu.memory_space<vmem>>, vector<128x128xf32>
    tpu.vector_store %arg14[%c0_18, %c0_19], %24 {strides = array<i32>} : memref<128x128xf32, #tpu.memory_space<vmem>>, vector<128x128xf32>,
    %26 = arith.truncf %24 : vector<128x128xf32> to vector<128x128xbf16>
    %c0_20 = arith.constant 0 : index
    %c0_21 = arith.constant 0 : index
    %27 = vector.load %arg8[%c0_20, %c0_21] : memref<128x64xbf16, #tpu.memory_space<vmem>>, vector<128x64xbf16>
    %cst_22 = arith.constant dense<0.000000e+00> : vector<128x64xf32>
    %28 = tpu.matmul %26, %27, %cst_22 {dimension_numbers = #tpu.dot_dimension_numbers<[1], [0], [0], [1], [0, 0, 1, 1], [], []>} : vector<128x128xbf16>, vector<128x64xbf16>, vector<128x64xf32> -> vector<128x64xf32>
    %c0_23 = arith.constant 0 : index
    %c0_24 = arith.constant 0 : index
    %29 = vector.load %arg9[%c0_23, %c0_24] : memref<1x64xf32, #tpu.memory_space<vmem>>, vector<1x64xf32>
    %30 = vector.broadcast %29 : vector<1x64xf32> to vector<128x64xf32>
    %31 = arith.addf %28, %30 : vector<128x64xf32>
    %cst_25 = arith.constant 0.000000e+00 : f32
    %32 = vector.broadcast %cst_25 : f32 to vector<128x64xf32>
    %33 = arith.maximumf %31, %32 : vector<128x64xf32>
    %34 = arith.truncf %33 : vector<128x64xf32> to vector<128x64xbf16>
    %c0_26 = arith.constant 0 : index
    %c0_27 = arith.constant 0 : index
    %35 = vector.load %arg10[%c0_26, %c0_27] : memref<64x128xbf16, #tpu.memory_space<vmem>>, vector<64x128xbf16>
    %cst_28 = arith.constant dense<0.000000e+00> : vector<128x128xf32>
    %36 = tpu.matmul %34, %35, %cst_28 {dimension_numbers = #tpu.dot_dimension_numbers<[1], [0], [0], [1], [0, 0, 1, 1], [], []>} : vector<128x64xbf16>, vector<64x128xbf16>, vector<128x128xf32> -> vector<128x128xf32>
    %c0_29 = arith.constant 0 : index
    %c0_30 = arith.constant 0 : index
    %37 = vector.load %arg11[%c0_29, %c0_30] : memref<1x128xf32, #tpu.memory_space<vmem>>, vector<1x128xf32>
    %38 = vector.broadcast %37 : vector<1x128xf32> to vector<128x128xf32>
    %39 = arith.addf %36, %38 : vector<128x128xf32>
    %cst_31 = arith.constant 0.000000e+00 : f32
    %40 = vector.broadcast %cst_31 : f32 to vector<128x128xf32>
    %41 = arith.maximumf %39, %40 : vector<128x128xf32>
    %42 = arith.truncf %41 : vector<128x128xf32> to vector<128x128xbf16>
    %c0_32 = arith.constant 0 : index
    %c0_33 = arith.constant 0 : index
    %43 = vector.load %arg12[%c0_32, %c0_33] : memref<128x256xbf16, #tpu.memory_space<vmem>>, vector<128x256xbf16>
    %cst_34 = arith.constant dense<0.000000e+00> : vector<128x256xf32>
    %44 = tpu.matmul %42, %43, %cst_34 {dimension_numbers = #tpu.dot_dimension_numbers<[1], [0], [0], [1], [0, 0, 1, 1], [], []>} : vector<128x128xbf16>, vector<128x256xbf16>, vector<128x256xf32> -> vector<128x256xf32>
    %c0_35 = arith.constant 0 : index
    %c0_36 = arith.constant 0 : index
    %45 = vector.load %arg13[%c0_35, %c0_36] : memref<1x256xf32, #tpu.memory_space<vmem>>, vector<1x256xf32>
    %46 = vector.broadcast %45 : vector<1x256xf32> to vector<128x256xf32>
    %47 = arith.addf %44, %46 : vector<128x256xf32>
    %c0_37 = arith.constant 0 : index
    %c0_38 = arith.constant 0 : index
    %48 = vector.load %arg15[%c0_37, %c0_38] : memref<128x256xf32, #tpu.memory_space<vmem>>, vector<128x256xf32>
    tpu.vector_store %arg15[%c0_37, %c0_38], %47 {strides = array<i32>} : memref<128x256xf32, #tpu.memory_space<vmem>>, vector<128x256xf32>,
    return
  }
  func.func @transform_0(%arg0: i32) -> (i32, i32) {
    %c0_i32 = arith.constant 0 : i32
    %c0_i32_0 = arith.constant 0 : i32
    return %arg0, %c0_i32 : i32, i32
  }
  func.func @transform_1(%arg0: i32) -> (i32, i32) {
    %c0_i32 = arith.constant 0 : i32
    %c0_i32_0 = arith.constant 0 : i32
    %c0_i32_1 = arith.constant 0 : i32
    return %c0_i32, %c0_i32_0 : i32, i32
  }
  func.func @transform_2(%arg0: i32) -> (i32, i32) {
    %c0_i32 = arith.constant 0 : i32
    %c0_i32_0 = arith.constant 0 : i32
    %c0_i32_1 = arith.constant 0 : i32
    return %c0_i32, %c0_i32_0 : i32, i32
  }
  func.func @transform_3(%arg0: i32) -> (i32, i32) {
    %c0_i32 = arith.constant 0 : i32
    %c0_i32_0 = arith.constant 0 : i32
    %c0_i32_1 = arith.constant 0 : i32
    return %c0_i32, %c0_i32_0 : i32, i32
  }
  func.func @transform_4(%arg0: i32) -> (i32, i32) {
    %c0_i32 = arith.constant 0 : i32
    %c0_i32_0 = arith.constant 0 : i32
    %c0_i32_1 = arith.constant 0 : i32
    return %c0_i32, %c0_i32_0 : i32, i32
  }
  func.func @transform_5(%arg0: i32) -> (i32, i32) {
    %c0_i32 = arith.constant 0 : i32
    %c0_i32_0 = arith.constant 0 : i32
    %c0_i32_1 = arith.constant 0 : i32
    return %c0_i32, %c0_i32_0 : i32, i32
  }
  func.func @transform_6(%arg0: i32) -> (i32, i32) {
    %c0_i32 = arith.constant 0 : i32
    %c0_i32_0 = arith.constant 0 : i32
    %c0_i32_1 = arith.constant 0 : i32
    return %c0_i32, %c0_i32_0 : i32, i32
  }
  func.func @transform_7(%arg0: i32) -> (i32, i32) {
    %c0_i32 = arith.constant 0 : i32
    %c0_i32_0 = arith.constant 0 : i32
    %c0_i32_1 = arith.constant 0 : i32
    return %c0_i32, %c0_i32_0 : i32, i32
  }
  func.func @transform_8(%arg0: i32) -> (i32, i32) {
    %c0_i32 = arith.constant 0 : i32
    %c0_i32_0 = arith.constant 0 : i32
    %c0_i32_1 = arith.constant 0 : i32
    return %c0_i32, %c0_i32_0 : i32, i32
  }
  func.func @transform_9(%arg0: i32) -> (i32, i32) {
    %c0_i32 = arith.constant 0 : i32
    %c0_i32_0 = arith.constant 0 : i32
    %c0_i32_1 = arith.constant 0 : i32
    return %c0_i32, %c0_i32_0 : i32, i32
  }
  func.func @transform_10(%arg0: i32) -> (i32, i32) {
    %c0_i32 = arith.constant 0 : i32
    %c0_i32_0 = arith.constant 0 : i32
    %c0_i32_1 = arith.constant 0 : i32
    return %c0_i32, %c0_i32_0 : i32, i32
  }
  func.func @transform_11(%arg0: i32) -> (i32, i32) {
    %c0_i32 = arith.constant 0 : i32
    %c0_i32_0 = arith.constant 0 : i32
    %c0_i32_1 = arith.constant 0 : i32
    return %c0_i32, %c0_i32_0 : i32, i32
  }
  func.func @transform_12(%arg0: i32) -> (i32, i32) {
    %c0_i32 = arith.constant 0 : i32
    %c0_i32_0 = arith.constant 0 : i32
    %c0_i32_1 = arith.constant 0 : i32
    return %c0_i32, %c0_i32_0 : i32, i32
  }
  func.func @transform_13(%arg0: i32) -> (i32, i32) {
    %c0_i32 = arith.constant 0 : i32
    %c0_i32_0 = arith.constant 0 : i32
    return %arg0, %c0_i32 : i32, i32
  }
  func.func @transform_14(%arg0: i32) -> (i32, i32) {
    %c0_i32 = arith.constant 0 : i32
    %c0_i32_0 = arith.constant 0 : i32
    return %arg0, %c0_i32 : i32, i32
  }
}

</mosaic_0001>

<llo_original>
// kernel: tpu_custom_call.1
$region0: #{tpu_custom_call.1}
  #allocation0 [shape = 'u32[]', space=smem, size = 0x4, offset = 0x4, fixed_abs, tag = 'smem constant byte address 0x4 - core index']
  #allocation1 [shape = 'u32[144,128]{1,0:T(1,128)}', space=vmem, size = 0x12000, scoped, tag = 'internal scratch']
  %s0 = inlined_call_operand.hbm [shape: f32[512,256], index: 0, kind: input, shape index: {}]
  %s1 = inlined_call_operand.vmem [shape: bf16[256,128], index: 1, kind: input, shape index: {}]
  %s2 = inlined_call_operand.hbm [shape: f32[1,128], index: 2, kind: input, shape index: {}]
  %s3 = inlined_call_operand.vmem [shape: bf16[128,64], index: 3, kind: input, shape index: {}]
  %s4 = inlined_call_operand.hbm [shape: f32[1,64], index: 4, kind: input, shape index: {}]
  %s5 = inlined_call_operand.vmem [shape: bf16[64,128], index: 5, kind: input, shape index: {}]
  %s6 = inlined_call_operand.hbm [shape: f32[1,128], index: 6, kind: input, shape index: {}]
  %s7 = inlined_call_operand.vmem [shape: bf16[128,64], index: 7, kind: input, shape index: {}]
  %s8 = inlined_call_operand.hbm [shape: f32[1,64], index: 8, kind: input, shape index: {}]
  %s9 = inlined_call_operand.vmem [shape: bf16[64,128], index: 9, kind: input, shape index: {}]
  %s10 = inlined_call_operand.vmem [shape: f32[1,128], index: 10, kind: input, shape index: {}]
  %s11 = inlined_call_operand.hbm [shape: bf16[128,256], index: 11, kind: input, shape index: {}]
  %s12 = inlined_call_operand.vmem [shape: f32[1,256], index: 12, kind: input, shape index: {}]
  %s13 = inlined_call_operand.hbm [shape: f32[512,128], index: 13, kind: output, shape index: {0}]
  %s14 = inlined_call_operand.hbm [shape: f32[512,256], index: 14, kind: output, shape index: {1}]
  %15 = xla_tuple %s13, %s14
  %s16 = sld [smem:[#allocation0]]
  $region117: #{tpu_custom_call.1} parent=0
    _
  %s18 = ssub.s32 1, %s16
  %s19 = scalar_select 0, %s18, %s16
  $region1: #{tpu_custom_call.1} parent=0
    #allocation2 [shape = 'u8[262144]{0}', space=vmem, size = 0x40000, scoped, tag = 'input window, operand 0']
    #allocation3 [shape = 's32[2]{0}', space=sflag, size = 0x8, scoped, tag = 'scoped memory for tpu_custom_call.1']
    #allocation4 [shape = 's32[2]{0}', space=sflag, size = 0x8, scoped, tag = 'scoped memory for tpu_custom_call.1']
    #allocation5 [shape = 'u8[512]{0}', space=vmem, size = 0x400, scoped, tag = 'input window, operand 2, single buffered']
    #allocation6 [shape = 's32[1]{0}', space=sflag, size = 0x4, scoped, tag = 'scoped memory for tpu_custom_call.1']
    #allocation7 [shape = 'u8[512]{0}', space=vmem, size = 0x400, scoped, tag = 'input window, operand 4, single buffered']
    #allocation8 [shape = 'u8[512]{0}', space=vmem, size = 0x400, scoped, tag = 'input window, operand 6, single buffered']
    #allocation9 [shape = 's32[1]{0}', space=sflag, size = 0x4, scoped, tag = 'scoped memory for tpu_custom_call.1']
    #allocation10 [shape = 'u8[512]{0}', space=vmem, size = 0x400, scoped, tag = 'input window, operand 8, single buffered']
    #allocation11 [shape = 'u8[65536]{0}', space=vmem, size = 0x10000, scoped, tag = 'input window, operand 11, single buffered']
    #allocation12 [shape = 's32[1]{0}', space=sflag, size = 0x4, scoped, tag = 'scoped memory for tpu_custom_call.1']
    #allocation13 [shape = 'u8[131072]{0}', space=vmem, size = 0x20000, scoped, tag = 'output window, operand 0']
    #allocation14 [shape = 'u8[262144]{0}', space=vmem, size = 0x40000, scoped, tag = 'output window, operand 1']
    #allocation15 [shape = 's32[2]{0}', space=sflag, size = 0x8, scoped, tag = 'scoped memory for tpu_custom_call.1']
    %20 = vsyncpa [#allocation3], 0
    %s21 = scalar_lea.sflag [#allocation3], 1
    %22 = vsyncpa %s21, 0
    %23 = vsyncpa [#allocation6], 0
    %24 = vsyncpa [#allocation9], 0
    %25 = vsyncpa [#allocation12], 0
    %26 = vsyncpa [#allocation4], 0
    %s27 = scalar_lea.sflag [#allocation4], 1
    %28 = vsyncpa %s27, 0
    %29 = vsyncpa [#allocation15], 0
    %s30 = scalar_lea.sflag [#allocation15], 1
    %31 = vsyncpa %s30, 0
    loop: start=0, step=1, limit=6
    $region2: #{tpu_custom_call.1} parent=1 // loop_pre_header
      _
    $region3: #{tpu_custom_call.1} parent=1 // loop_header
      %s33 = sphi 0, %s37
      %p34 = scmp.ge.s32.totalorder %s33, 6
      %s43 = sphi 0, %s45
      %s46 = sphi 0, %s43
      %s47 = sphi 0, %s46
      %s63 = sphi 0, %s47
      %s67 = sphi 0, %s67
      %s69 = sphi 0, %s67
      %s70 = sphi 0, %s69
      %s84 = sphi 0, %s70
      %s88 = sphi 0, %s88
      %s90 = sphi 0, %s88
      %s91 = sphi 0, %s90
      %s105 = sphi 0, %s91
      %s109 = sphi 0, %s109
      %s111 = sphi 0, %s109
      %s112 = sphi 0, %s111
      %s126 = sphi 0, %s112
      %s130 = sphi 0, %s130
      %s132 = sphi 0, %s130
      %s133 = sphi 0, %s132
      %s147 = sphi 0, %s133
      %s151 = sphi 0, %s151
      %s153 = sphi 0, %s151
      %s154 = sphi 0, %s153
      %s168 = sphi 0, %s154
      %s172 = sphi 0, %s172
      %s174 = sphi 0, %s172
      %s175 = sphi 0, %s174
      %s189 = sphi 0, %s175
      %s193 = sphi 0, %s193
      %s195 = sphi 0, %s193
      %s196 = sphi 0, %s195
      %s210 = sphi 0, %s196
      %s214 = sphi 0, %s214
      %s216 = sphi 0, %s214
      %s217 = sphi 0, %s216
      %s231 = sphi 0, %s217
      %s235 = sphi 0, %s235
      %s237 = sphi 0, %s235
      %s238 = sphi 0, %s237
      %s252 = sphi 0, %s238
      %s256 = sphi 0, %s256
      %s258 = sphi 0, %s256
      %s259 = sphi 0, %s258
      %s273 = sphi 0, %s259
      %s277 = sphi 0, %s277
      %s279 = sphi 0, %s277
      %s280 = sphi 0, %s279
      %s294 = sphi 0, %s280
      %s298 = sphi 0, %s298
      %s300 = sphi 0, %s298
      %s301 = sphi 0, %s300
      %s315 = sphi 0, %s301
      %s321 = sphi 0, %s323
      %s324 = sphi 0, %s321
      %s325 = sphi 0, %s324
      %s341 = sphi 0, %s325
      %s347 = sphi 0, %s349
      %s350 = sphi 0, %s347
      %s351 = sphi 0, %s350
      %s367 = sphi 0, %s351
    $region4: #{tpu_custom_call.1} parent=1 // loop_header_branch
      %36 = sbr.rel (%p34) target = $region8
    $region5: #{tpu_custom_call.1} parent=1 // loop_body
      %s38 = ssub.s32 %s33, 1
      %s39 = ssub.s32 %s33, 2
      %s40 = sadd.s32 %s33, 1
      %s41 = ssub.s32 %s33, %s40
      %p42 = scmp.eq.s32.totalorder %s41, 0
      %s44 = sadd.s32 %s43, 1
      %s45 = scalar_select %p42, %s43, %s44
      %p48 = pneg %p42
      %p49 = scmp.eq.s32.totalorder %s33, 3
      %p50 = por %p48, %p49
      %p51 = scmp.ne.s32.totalorder %s43, %s46
      %p52 = scmp.eq.s32.totalorder %s33, 0
      %p53 = por %p51, %p52
      %p54 = scmp.ne.s32.totalorder %s43, %s46
      %p55 = scmp.eq.s32.totalorder %s38, 3
      %p56 = por %p54, %p55
      %p57 = scmp.ne.s32.totalorder %s46, %s47
      %p58 = scmp.eq.s32.totalorder %s38, 0
      %p59 = por %p57, %p58
      %p60 = scmp.ne.s32.totalorder %s46, %s47
      %p61 = scmp.eq.s32.totalorder %s39, 3
      %p62 = por %p60, %p61
      %p64 = scmp.ne.s32.totalorder %s47, %s63
      %p65 = scmp.eq.s32.totalorder %s39, 0
      %p66 = por %p64, %p65
      %s68 = sadd.s32 %s67, 1
      %p71 = scmp.eq.s32.totalorder %s33, 3
      %p72 = scmp.ne.s32.totalorder %s67, %s69
      %p73 = scmp.eq.s32.totalorder %s33, 0
      %p74 = por %p72, %p73
      %p75 = scmp.ne.s32.totalorder %s67, %s69
      %p76 = scmp.eq.s32.totalorder %s38, 3
      %p77 = por %p75, %p76
      %p78 = scmp.ne.s32.totalorder %s69, %s70
      %p79 = scmp.eq.s32.totalorder %s38, 0
      %p80 = por %p78, %p79
      %p81 = scmp.ne.s32.totalorder %s69, %s70
      %p82 = scmp.eq.s32.totalorder %s39, 3
      %p83 = por %p81, %p82
      %p85 = scmp.ne.s32.totalorder %s70, %s84
      %p86 = scmp.eq.s32.totalorder %s39, 0
      %p87 = por %p85, %p86
      %s89 = sadd.s32 %s88, 1
      %p92 = scmp.eq.s32.totalorder %s33, 3
      %p93 = scmp.ne.s32.totalorder %s88, %s90
      %p94 = scmp.eq.s32.totalorder %s33, 0
      %p95 = por %p93, %p94
      %p96 = scmp.ne.s32.totalorder %s88, %s90
      %p97 = scmp.eq.s32.totalorder %s38, 3
      %p98 = por %p96, %p97
      %p99 = scmp.ne.s32.totalorder %s90, %s91
      %p100 = scmp.eq.s32.totalorder %s38, 0
      %p101 = por %p99, %p100
      %p102 = scmp.ne.s32.totalorder %s90, %s91
      %p103 = scmp.eq.s32.totalorder %s39, 3
      %p104 = por %p102, %p103
      %p106 = scmp.ne.s32.totalorder %s91, %s105
      %p107 = scmp.eq.s32.totalorder %s39, 0
      %p108 = por %p106, %p107
      %s110 = sadd.s32 %s109, 1
      %p113 = scmp.eq.s32.totalorder %s33, 3
      %p114 = scmp.ne.s32.totalorder %s109, %s111
      %p115 = scmp.eq.s32.totalorder %s33, 0
      %p116 = por %p114, %p115
      %p117 = scmp.ne.s32.totalorder %s109, %s111
      %p118 = scmp.eq.s32.totalorder %s38, 3
      %p119 = por %p117, %p118
      %p120 = scmp.ne.s32.totalorder %s111, %s112
      %p121 = scmp.eq.s32.totalorder %s38, 0
      %p122 = por %p120, %p121
      %p123 = scmp.ne.s32.totalorder %s111, %s112
      %p124 = scmp.eq.s32.totalorder %s39, 3
      %p125 = por %p123, %p124
      %p127 = scmp.ne.s32.totalorder %s112, %s126
      %p128 = scmp.eq.s32.totalorder %s39, 0
      %p129 = por %p127, %p128
      %s131 = sadd.s32 %s130, 1
      %p134 = scmp.eq.s32.totalorder %s33, 3
      %p135 = scmp.ne.s32.totalorder %s130, %s132
      %p136 = scmp.eq.s32.totalorder %s33, 0
      %p137 = por %p135, %p136
      %p138 = scmp.ne.s32.totalorder %s130, %s132
      %p139 = scmp.eq.s32.totalorder %s38, 3
      %p140 = por %p138, %p139
      %p141 = scmp.ne.s32.totalorder %s132, %s133
      %p142 = scmp.eq.s32.totalorder %s38, 0
      %p143 = por %p141, %p142
      %p144 = scmp.ne.s32.totalorder %s132, %s133
      %p145 = scmp.eq.s32.totalorder %s39, 3
      %p146 = por %p144, %p145
      %p148 = scmp.ne.s32.totalorder %s133, %s147
      %p149 = scmp.eq.s32.totalorder %s39, 0
      %p150 = por %p148, %p149
      %s152 = sadd.s32 %s151, 1
      %p155 = scmp.eq.s32.totalorder %s33, 3
      %p156 = scmp.ne.s32.totalorder %s151, %s153
      %p157 = scmp.eq.s32.totalorder %s33, 0
      %p158 = por %p156, %p157
      %p159 = scmp.ne.s32.totalorder %s151, %s153
      %p160 = scmp.eq.s32.totalorder %s38, 3
      %p161 = por %p159, %p160
      %p162 = scmp.ne.s32.totalorder %s153, %s154
      %p163 = scmp.eq.s32.totalorder %s38, 0
      %p164 = por %p162, %p163
      %p165 = scmp.ne.s32.totalorder %s153, %s154
      %p166 = scmp.eq.s32.totalorder %s39, 3
      %p167 = por %p165, %p166
      %p169 = scmp.ne.s32.totalorder %s154, %s168
      %p170 = scmp.eq.s32.totalorder %s39, 0
      %p171 = por %p169, %p170
      %s173 = sadd.s32 %s172, 1
      %p176 = scmp.eq.s32.totalorder %s33, 3
      %p177 = scmp.ne.s32.totalorder %s172, %s174
      %p178 = scmp.eq.s32.totalorder %s33, 0
      %p179 = por %p177, %p178
      %p180 = scmp.ne.s32.totalorder %s172, %s174
      %p181 = scmp.eq.s32.totalorder %s38, 3
      %p182 = por %p180, %p181
      %p183 = scmp.ne.s32.totalorder %s174, %s175
      %p184 = scmp.eq.s32.totalorder %s38, 0
      %p185 = por %p183, %p184
      %p186 = scmp.ne.s32.totalorder %s174, %s175
      %p187 = scmp.eq.s32.totalorder %s39, 3
      %p188 = por %p186, %p187
      %p190 = scmp.ne.s32.totalorder %s175, %s189
      %p191 = scmp.eq.s32.totalorder %s39, 0
      %p192 = por %p190, %p191
      %s194 = sadd.s32 %s193, 1
      %p197 = scmp.eq.s32.totalorder %s33, 3
      %p198 = scmp.ne.s32.totalorder %s193, %s195
      %p199 = scmp.eq.s32.totalorder %s33, 0
      %p200 = por %p198, %p199
      %p201 = scmp.ne.s32.totalorder %s193, %s195
      %p202 = scmp.eq.s32.totalorder %s38, 3
      %p203 = por %p201, %p202
      %p204 = scmp.ne.s32.totalorder %s195, %s196
      %p205 = scmp.eq.s32.totalorder %s38, 0
      %p206 = por %p204, %p205
      %p207 = scmp.ne.s32.totalorder %s195, %s196
      %p208 = scmp.eq.s32.totalorder %s39, 3
      %p209 = por %p207, %p208
      %p211 = scmp.ne.s32.totalorder %s196, %s210
      %p212 = scmp.eq.s32.totalorder %s39, 0
      %p213 = por %p211, %p212
      %s215 = sadd.s32 %s214, 1
      %p218 = scmp.eq.s32.totalorder %s33, 3
      %p219 = scmp.ne.s32.totalorder %s214, %s216
      %p220 = scmp.eq.s32.totalorder %s33, 0
      %p221 = por %p219, %p220
      %p222 = scmp.ne.s32.totalorder %s214, %s216
      %p223 = scmp.eq.s32.totalorder %s38, 3
      %p224 = por %p222, %p223
      %p225 = scmp.ne.s32.totalorder %s216, %s217
      %p226 = scmp.eq.s32.totalorder %s38, 0
      %p227 = por %p225, %p226
      %p228 = scmp.ne.s32.totalorder %s216, %s217
      %p229 = scmp.eq.s32.totalorder %s39, 3
      %p230 = por %p228, %p229
      %p232 = scmp.ne.s32.totalorder %s217, %s231
      %p233 = scmp.eq.s32.totalorder %s39, 0
      %p234 = por %p232, %p233
      %s236 = sadd.s32 %s235, 1
      %p239 = scmp.eq.s32.totalorder %s33, 3
      %p240 = scmp.ne.s32.totalorder %s235, %s237
      %p241 = scmp.eq.s32.totalorder %s33, 0
      %p242 = por %p240, %p241
      %p243 = scmp.ne.s32.totalorder %s235, %s237
      %p244 = scmp.eq.s32.totalorder %s38, 3
      %p245 = por %p243, %p244
      %p246 = scmp.ne.s32.totalorder %s237, %s238
      %p247 = scmp.eq.s32.totalorder %s38, 0
      %p248 = por %p246, %p247
      %p249 = scmp.ne.s32.totalorder %s237, %s238
      %p250 = scmp.eq.s32.totalorder %s39, 3
      %p251 = por %p249, %p250
      %p253 = scmp.ne.s32.totalorder %s238, %s252
      %p254 = scmp.eq.s32.totalorder %s39, 0
      %p255 = por %p253, %p254
      %s257 = sadd.s32 %s256, 1
      %p260 = scmp.eq.s32.totalorder %s33, 3
      %p261 = scmp.ne.s32.totalorder %s256, %s258
      %p262 = scmp.eq.s32.totalorder %s33, 0
      %p263 = por %p261, %p262
      %p264 = scmp.ne.s32.totalorder %s256, %s258
      %p265 = scmp.eq.s32.totalorder %s38, 3
      %p266 = por %p264, %p265
      %p267 = scmp.ne.s32.totalorder %s258, %s259
      %p268 = scmp.eq.s32.totalorder %s38, 0
      %p269 = por %p267, %p268
      %p270 = scmp.ne.s32.totalorder %s258, %s259
      %p271 = scmp.eq.s32.totalorder %s39, 3
      %p272 = por %p270, %p271
      %p274 = scmp.ne.s32.totalorder %s259, %s273
      %p275 = scmp.eq.s32.totalorder %s39, 0
      %p276 = por %p274, %p275
      %s278 = sadd.s32 %s277, 1
      %p281 = scmp.eq.s32.totalorder %s33, 3
      %p282 = scmp.ne.s32.totalorder %s277, %s279
      %p283 = scmp.eq.s32.totalorder %s33, 0
      %p284 = por %p282, %p283
      %p285 = scmp.ne.s32.totalorder %s277, %s279
      %p286 = scmp.eq.s32.totalorder %s38, 3
      %p287 = por %p285, %p286
      %p288 = scmp.ne.s32.totalorder %s279, %s280
      %p289 = scmp.eq.s32.totalorder %s38, 0
      %p290 = por %p288, %p289
      %p291 = scmp.ne.s32.totalorder %s279, %s280
      %p292 = scmp.eq.s32.totalorder %s39, 3
      %p293 = por %p291, %p292
      %p295 = scmp.ne.s32.totalorder %s280, %s294
      %p296 = scmp.eq.s32.totalorder %s39, 0
      %p297 = por %p295, %p296
      %s299 = sadd.s32 %s298, 1
      %p302 = scmp.eq.s32.totalorder %s33, 3
      %p303 = scmp.ne.s32.totalorder %s298, %s300
      %p304 = scmp.eq.s32.totalorder %s33, 0
      %p305 = por %p303, %p304
      %p306 = scmp.ne.s32.totalorder %s298, %s300
      %p307 = scmp.eq.s32.totalorder %s38, 3
      %p308 = por %p306, %p307
      %p309 = scmp.ne.s32.totalorder %s300, %s301
      %p310 = scmp.eq.s32.totalorder %s38, 0
      %p311 = por %p309, %p310
      %p312 = scmp.ne.s32.totalorder %s300, %s301
      %p313 = scmp.eq.s32.totalorder %s39, 3
      %p314 = por %p312, %p313
      %p316 = scmp.ne.s32.totalorder %s301, %s315
      %p317 = scmp.eq.s32.totalorder %s39, 0
      %p318 = por %p316, %p317
      %s319 = ssub.s32 %s33, %s40
      %p320 = scmp.eq.s32.totalorder %s319, 0
      %s322 = sadd.s32 %s321, 1
      %s323 = scalar_select %p320, %s321, %s322
      %p326 = pneg %p320
      %p327 = scmp.eq.s32.totalorder %s33, 3
      %p328 = por %p326, %p327
      %p329 = scmp.ne.s32.totalorder %s321, %s324
      %p330 = scmp.eq.s32.totalorder %s33, 0
      %p331 = por %p329, %p330
      %p332 = scmp.ne.s32.totalorder %s321, %s324
      %p333 = scmp.eq.s32.totalorder %s38, 3
      %p334 = por %p332, %p333
      %p335 = scmp.ne.s32.totalorder %s324, %s325
      %p336 = scmp.eq.s32.totalorder %s38, 0
      %p337 = por %p335, %p336
      %p338 = scmp.ne.s32.totalorder %s324, %s325
      %p339 = scmp.eq.s32.totalorder %s39, 3
      %p340 = por %p338, %p339
      %p342 = scmp.ne.s32.totalorder %s325, %s341
      %p343 = scmp.eq.s32.totalorder %s39, 0
      %p344 = por %p342, %p343
      %s345 = ssub.s32 %s33, %s40
      %p346 = scmp.eq.s32.totalorder %s345, 0
      %s348 = sadd.s32 %s347, 1
      %s349 = scalar_select %p346, %s347, %s348
      %p352 = pneg %p346
      %p353 = scmp.eq.s32.totalorder %s33, 3
      %p354 = por %p352, %p353
      %p355 = scmp.ne.s32.totalorder %s347, %s350
      %p356 = scmp.eq.s32.totalorder %s33, 0
      %p357 = por %p355, %p356
      %p358 = scmp.ne.s32.totalorder %s347, %s350
      %p359 = scmp.eq.s32.totalorder %s38, 3
      %p360 = por %p358, %p359
      %p361 = scmp.ne.s32.totalorder %s350, %s351
      %p362 = scmp.eq.s32.totalorder %s38, 0
      %p363 = por %p361, %p362
      %p364 = scmp.ne.s32.totalorder %s350, %s351
      %p365 = scmp.eq.s32.totalorder %s39, 3
      %p366 = por %p364, %p365
      %p368 = scmp.ne.s32.totalorder %s351, %s367
      %p369 = scmp.eq.s32.totalorder %s39, 0
      %p370 = por %p368, %p369
      %p371 = scmp.le.s32.totalorder 1, %s33
      %p372 = scmp.lt.s32.totalorder %s33, 5
      %p373 = pnand %p371, %p372
      %p374 = pneg %p373
      // Predicated region
      $region9: #{tpu_custom_call.1} parent=5 // pred_check
        _
      $region10: #{tpu_custom_call.1} parent=5 // pred_check_branch
        %376 = sbr.rel (%p373) target = $region12
      $region11: #{tpu_custom_call.1} parent=5 // pred_region
        %s377 = ssub.s32 %s33, 1
        // Predicated region
        $region13: #{tpu_custom_call.1} parent=11 // pred_check
          %p378 = pneg %p80
        $region14: #{tpu_custom_call.1} parent=11 // pred_check_branch
          %380 = sbr.rel (%p378) target = $region16
        $region15: #{tpu_custom_call.1} parent=11 // pred_region
          _
        $region16: #{tpu_custom_call.1} parent=11 // pred_fallthru
          _
        // Predicated region
        $region17: #{tpu_custom_call.1} parent=11 // pred_check
          %p381 = pneg %p101
        $region18: #{tpu_custom_call.1} parent=11 // pred_check_branch
          %383 = sbr.rel (%p381) target = $region20
        $region19: #{tpu_custom_call.1} parent=11 // pred_region
          %s385 = ssub.s32 16, 16
          %386 = vsyncadd [#allocation6], %s385
          %s388 = sshll.u32 [#allocation5], 4
          %s389 = int_to_ptr.vmem [resolvable:$true] %s388
          %391 = dma.hbm_to_vmem [thread:$0]  %s2, 16, %s389, [#allocation6]
        $region20: #{tpu_custom_call.1} parent=11 // pred_fallthru
          _
        // Predicated region
        $region21: #{tpu_custom_call.1} parent=11 // pred_check
          %p392 = pneg %p122
        $region22: #{tpu_custom_call.1} parent=11 // pred_check_branch
          %394 = sbr.rel (%p392) target = $region24
        $region23: #{tpu_custom_call.1} parent=11 // pred_region
          _
        $region24: #{tpu_custom_call.1} parent=11 // pred_fallthru
          _
        // Predicated region
        $region25: #{tpu_custom_call.1} parent=11 // pred_check
          %p395 = pneg %p143
        $region26: #{tpu_custom_call.1} parent=11 // pred_check_branch
          %397 = sbr.rel (%p395) target = $region28
        $region27: #{tpu_custom_call.1} parent=11 // pred_region
          %s399 = ssub.s32 16, 16
          %400 = vsyncadd [#allocation6], %s399
          %s402 = sshll.u32 [#allocation7], 4
          %s403 = int_to_ptr.vmem [resolvable:$true] %s402
          %405 = dma.hbm_to_vmem [thread:$0]  %s4, 16, %s403, [#allocation6]
        $region28: #{tpu_custom_call.1} parent=11 // pred_fallthru
          _
        // Predicated region
        $region29: #{tpu_custom_call.1} parent=11 // pred_check
          %p406 = pneg %p164
        $region30: #{tpu_custom_call.1} parent=11 // pred_check_branch
          %408 = sbr.rel (%p406) target = $region32
        $region31: #{tpu_custom_call.1} parent=11 // pred_region
          _
        $region32: #{tpu_custom_call.1} parent=11 // pred_fallthru
          _
        // Predicated region
        $region33: #{tpu_custom_call.1} parent=11 // pred_check
          %p409 = pneg %p185
        $region34: #{tpu_custom_call.1} parent=11 // pred_check_branch
          %411 = sbr.rel (%p409) target = $region36
        $region35: #{tpu_custom_call.1} parent=11 // pred_region
          %s413 = ssub.s32 16, 16
          %414 = vsyncadd [#allocation9], %s413
          %s416 = sshll.u32 [#allocation8], 4
          %s417 = int_to_ptr.vmem [resolvable:$true] %s416
          %419 = dma.hbm_to_vmem [thread:$0]  %s6, 16, %s417, [#allocation9]
        $region36: #{tpu_custom_call.1} parent=11 // pred_fallthru
          _
        // Predicated region
        $region37: #{tpu_custom_call.1} parent=11 // pred_check
          %p420 = pneg %p206
        $region38: #{tpu_custom_call.1} parent=11 // pred_check_branch
          %422 = sbr.rel (%p420) target = $region40
        $region39: #{tpu_custom_call.1} parent=11 // pred_region
          _
        $region40: #{tpu_custom_call.1} parent=11 // pred_fallthru
          _
        // Predicated region
        $region41: #{tpu_custom_call.1} parent=11 // pred_check
          %p423 = pneg %p227
        $region42: #{tpu_custom_call.1} parent=11 // pred_check_branch
          %425 = sbr.rel (%p423) target = $region44
        $region43: #{tpu_custom_call.1} parent=11 // pred_region
          %s427 = ssub.s32 16, 16
          %428 = vsyncadd [#allocation9], %s427
          %s430 = sshll.u32 [#allocation10], 4
          %s431 = int_to_ptr.vmem [resolvable:$true] %s430
          %433 = dma.hbm_to_vmem [thread:$0]  %s8, 16, %s431, [#allocation9]
        $region44: #{tpu_custom_call.1} parent=11 // pred_fallthru
          _
        // Predicated region
        $region45: #{tpu_custom_call.1} parent=11 // pred_check
          %p434 = pneg %p248
        $region46: #{tpu_custom_call.1} parent=11 // pred_check_branch
          %436 = sbr.rel (%p434) target = $region48
        $region47: #{tpu_custom_call.1} parent=11 // pred_region
          _
        $region48: #{tpu_custom_call.1} parent=11 // pred_fallthru
          _
        // Predicated region
        $region49: #{tpu_custom_call.1} parent=11 // pred_check
          %p437 = pneg %p269
        $region50: #{tpu_custom_call.1} parent=11 // pred_check_branch
          %439 = sbr.rel (%p437) target = $region52
        $region51: #{tpu_custom_call.1} parent=11 // pred_region
          _
        $region52: #{tpu_custom_call.1} parent=11 // pred_fallthru
          _
        // Predicated region
        $region53: #{tpu_custom_call.1} parent=11 // pred_check
          %p440 = pneg %p290
        $region54: #{tpu_custom_call.1} parent=11 // pred_check_branch
          %442 = sbr.rel (%p440) target = $region56
        $region55: #{tpu_custom_call.1} parent=11 // pred_region
          %s444 = ssub.s32 2048, 2048
          %445 = vsyncadd [#allocation12], %s444
          %s446 = sshll.u32 [#allocation11], 4
          %s447 = int_to_ptr.vmem [resolvable:$true] %s446
          %452 = dma.hbm_to_vmem [thread:$0]  %s11, 2048, %s447, [#allocation12], 128, 128, 8
        $region56: #{tpu_custom_call.1} parent=11 // pred_fallthru
          _
        // Predicated region
        $region57: #{tpu_custom_call.1} parent=11 // pred_check
          %p453 = pneg %p311
        $region58: #{tpu_custom_call.1} parent=11 // pred_check_branch
          %455 = sbr.rel (%p453) target = $region60
        $region59: #{tpu_custom_call.1} parent=11 // pred_region
          _
        $region60: #{tpu_custom_call.1} parent=11 // pred_fallthru
          _
      $region12: #{tpu_custom_call.1} parent=5 // pred_fallthru
        _
      %p456 = scmp.lt.s32.totalorder %s33, 4
      // Predicated region
      $region61: #{tpu_custom_call.1} parent=5 // pred_check
        %p457 = pneg %p456
      $region62: #{tpu_custom_call.1} parent=5 // pred_check_branch
        %459 = sbr.rel (%p457) target = $region64
      $region63: #{tpu_custom_call.1} parent=5 // pred_region
        // Predicated region
        $region65: #{tpu_custom_call.1} parent=63 // pred_check
          %p460 = pneg %p53
        $region66: #{tpu_custom_call.1} parent=63 // pred_check_branch
          %462 = sbr.rel (%p460) target = $region68
        $region67: #{tpu_custom_call.1} parent=63 // pred_region
          %s463 = sand.u32 %s43, 1
          %s464 = scalar_lea.sflag [#allocation3], %s463
          %s465 = sand.u32 %s43, 1
          %s466 = smul.addr %s465, 256
          %s467 = scalar_lea.vmem [#allocation2], %s466
          %s468 = smul.u32 16, %s33
          %s470 = ssub.s32 4096, 4096
          %471 = vsyncadd %s464, %s470
          %s472 = smul.addr %s468, 2
          %s473 = smul.addr %s472, 128
          %s474 = scalar_lea.hbm %s0, %s473
          %s475 = sshll.u32 %s467, 4
          %s476 = int_to_ptr.vmem [resolvable:$true] %s475
          %481 = dma.hbm_to_vmem [thread:$0]  %s474, 4096, %s476, %s464, 256, 256, 16
        $region68: #{tpu_custom_call.1} parent=63 // pred_fallthru
          _
      $region64: #{tpu_custom_call.1} parent=5 // pred_fallthru
        _
      %p482 = scmp.le.s32.totalorder 1, %s33
      %p483 = scmp.lt.s32.totalorder %s33, 5
      %p484 = pnand %p482, %p483
      %p485 = pneg %p484
      // Predicated region
      $region69: #{tpu_custom_call.1} parent=5 // pred_check
        _
      $region70: #{tpu_custom_call.1} parent=5 // pred_check_branch
        %487 = sbr.rel (%p484) target = $region72
      $region71: #{tpu_custom_call.1} parent=5 // pred_region
        %s488 = ssub.s32 %s33, 1
        %s489 = sand.u32 %s46, 1
        %s490 = scalar_lea.sflag [#allocation3], %s489
        %s491 = sand.u32 %s46, 1
        %s492 = smul.addr %s491, 256
        %s493 = scalar_lea.vmem [#allocation2], %s492
        // Predicated region
        $region73: #{tpu_custom_call.1} parent=71 // pred_check
          %p494 = pneg %p59
        $region74: #{tpu_custom_call.1} parent=71 // pred_check_branch
          %496 = sbr.rel (%p494) target = $region76
        $region75: #{tpu_custom_call.1} parent=71 // pred_region
          %497 = dma.done %s490, 4096
        $region76: #{tpu_custom_call.1} parent=71 // pred_fallthru
          _
        // Predicated region
        $region77: #{tpu_custom_call.1} parent=71 // pred_check
          %p498 = pneg %p101
        $region78: #{tpu_custom_call.1} parent=71 // pred_check_branch
          %500 = sbr.rel (%p498) target = $region80
        $region79: #{tpu_custom_call.1} parent=71 // pred_region
          %501 = dma.done [#allocation6], 16
        $region80: #{tpu_custom_call.1} parent=71 // pred_fallthru
          _
        // Predicated region
        $region81: #{tpu_custom_call.1} parent=71 // pred_check
          %p502 = pneg %p143
        $region82: #{tpu_custom_call.1} parent=71 // pred_check_branch
          %504 = sbr.rel (%p502) target = $region84
        $region83: #{tpu_custom_call.1} parent=71 // pred_region
          %505 = dma.done [#allocation6], 16
        $region84: #{tpu_custom_call.1} parent=71 // pred_fallthru
          _
        // Predicated region
        $region85: #{tpu_custom_call.1} parent=71 // pred_check
          %p506 = pneg %p185
        $region86: #{tpu_custom_call.1} parent=71 // pred_check_branch
          %508 = sbr.rel (%p506) target = $region88
        $region87: #{tpu_custom_call.1} parent=71 // pred_region
          %509 = dma.done [#allocation9], 16
        $region88: #{tpu_custom_call.1} parent=71 // pred_fallthru
          _
        // Predicated region
        $region89: #{tpu_custom_call.1} parent=71 // pred_check
          %p510 = pneg %p227
        $region90: #{tpu_custom_call.1} parent=71 // pred_check_branch
          %512 = sbr.rel (%p510) target = $region92
        $region91: #{tpu_custom_call.1} parent=71 // pred_region
          %513 = dma.done [#allocation9], 16
        $region92: #{tpu_custom_call.1} parent=71 // pred_fallthru
          _
        // Predicated region
        $region93: #{tpu_custom_call.1} parent=71 // pred_check
          %p514 = pneg %p290
        $region94: #{tpu_custom_call.1} parent=71 // pred_check_branch
          %516 = sbr.rel (%p514) target = $region96
        $region95: #{tpu_custom_call.1} parent=71 // pred_region
          %517 = dma.done [#allocation12], 2048
        $region96: #{tpu_custom_call.1} parent=71 // pred_fallthru
          _
        %s518 = sand.u32 %s46, 1
        %s519 = scalar_lea.sflag [#allocation3], %s518
        %s520 = sand.u32 %s46, 1
        %s521 = smul.addr %s520, 256
        %s522 = scalar_lea.vmem [#allocation2], %s521
        %p523 = pneg %p59
        %p524 = pneg %p56
        %p525 = pneg %p80
        %p526 = pneg %p77
        %p527 = pneg %p101
        %p528 = pneg %p98
        %p529 = pneg %p122
        %p530 = pneg %p119
        %p531 = pneg %p143
        %p532 = pneg %p140
        %p533 = pneg %p164
        %p534 = pneg %p161
        %p535 = pneg %p185
        %p536 = pneg %p182
        %p537 = pneg %p206
        %p538 = pneg %p203
        %p539 = pneg %p227
        %p540 = pneg %p224
        %p541 = pneg %p248
        %p542 = pneg %p245
        %p543 = pneg %p269
        %p544 = pneg %p266
        %p545 = pneg %p290
        %p546 = pneg %p287
        %p547 = pneg %p311
        %p548 = pneg %p308
        %p549 = pneg %p337
        %p550 = pneg %p334
        %s551 = sand.u32 %s324, 1
        %s552 = scalar_lea.sflag [#allocation4], %s551
        %s553 = sand.u32 %s324, 1
        %s554 = smul.addr %s553, 128
        %s555 = scalar_lea.vmem [#allocation13], %s554
        %p556 = pneg %p363
        %p557 = pneg %p360
        %s558 = sand.u32 %s350, 1
        %s559 = scalar_lea.sflag [#allocation15], %s558
        %s560 = sand.u32 %s350, 1
        %s561 = smul.addr %s560, 256
        %s562 = scalar_lea.vmem [#allocation14], %s561
        %s563 = smul.u32 16, %s38
        %s564 = smul.u32 16, %s38
        %s565 = smul.u32 16, %s38
        %v567 = vld [vmem:[%s493] sm:$0xff]
        %v568 = vld [vmem:[%s493 + $0x8] sm:$0xff]
        %v569 = vld [vmem:[%s493 + $0x10] sm:$0xff]
        %v570 = vld [vmem:[%s493 + $0x18] sm:$0xff]
        %v571 = vld [vmem:[%s493 + $0x20] sm:$0xff]
        %v572 = vld [vmem:[%s493 + $0x28] sm:$0xff]
        %v573 = vld [vmem:[%s493 + $0x30] sm:$0xff]
        %v574 = vld [vmem:[%s493 + $0x38] sm:$0xff]
        %v575 = vld [vmem:[%s493 + $0x40] sm:$0xff]
        %v576 = vld [vmem:[%s493 + $0x48] sm:$0xff]
        %v577 = vld [vmem:[%s493 + $0x50] sm:$0xff]
        %v578 = vld [vmem:[%s493 + $0x58] sm:$0xff]
        %v579 = vld [vmem:[%s493 + $0x60] sm:$0xff]
        %v580 = vld [vmem:[%s493 + $0x68] sm:$0xff]
        %v581 = vld [vmem:[%s493 + $0x70] sm:$0xff]
        %v582 = vld [vmem:[%s493 + $0x78] sm:$0xff]
        %v583 = vld [vmem:[%s493 + $0x80] sm:$0xff]
        %v584 = vld [vmem:[%s493 + $0x88] sm:$0xff]
        %v585 = vld [vmem:[%s493 + $0x90] sm:$0xff]
        %v586 = vld [vmem:[%s493 + $0x98] sm:$0xff]
        %v587 = vld [vmem:[%s493 + $0xa0] sm:$0xff]
        %v588 = vld [vmem:[%s493 + $0xa8] sm:$0xff]
        %v589 = vld [vmem:[%s493 + $0xb0] sm:$0xff]
        %v590 = vld [vmem:[%s493 + $0xb8] sm:$0xff]
        %v591 = vld [vmem:[%s493 + $0xc0] sm:$0xff]
        %v592 = vld [vmem:[%s493 + $0xc8] sm:$0xff]
        %v593 = vld [vmem:[%s493 + $0xd0] sm:$0xff]
        %v594 = vld [vmem:[%s493 + $0xd8] sm:$0xff]
        %v595 = vld [vmem:[%s493 + $0xe0] sm:$0xff]
        %v596 = vld [vmem:[%s493 + $0xe8] sm:$0xff]
        %v597 = vld [vmem:[%s493 + $0xf0] sm:$0xff]
        %v598 = vld [vmem:[%s493 + $0xf8] sm:$0xff]
        %v599 = vpack.c.bf16 %v569, %v567
        %v600 = vpack.c.bf16 %v570, %v568
        %v601 = vpack.c.bf16 %v573, %v571
        %v602 = vpack.c.bf16 %v574, %v572
        %v603 = vpack.c.bf16 %v577, %v575
        %v604 = vpack.c.bf16 %v578, %v576
        %v605 = vpack.c.bf16 %v581, %v579
        %v606 = vpack.c.bf16 %v582, %v580
        %v607 = vpack.c.bf16 %v585, %v583
        %v608 = vpack.c.bf16 %v586, %v584
        %v609 = vpack.c.bf16 %v589, %v587
        %v610 = vpack.c.bf16 %v590, %v588
        %v611 = vpack.c.bf16 %v593, %v591
        %v612 = vpack.c.bf16 %v594, %v592
        %v613 = vpack.c.bf16 %v597, %v595
        %v614 = vpack.c.bf16 %v598, %v596
        %v615 = vld [vmem:[%s1] sm:$0xf]
        %v616 = vld [vmem:[%s1 + $0x4] sm:$0xf]
        %v617 = vld [vmem:[%s1 + $0x8] sm:$0xf]
        %v618 = vld [vmem:[%s1 + $0xc] sm:$0xf]
        %v619 = vld [vmem:[%s1 + $0x10] sm:$0xf]
        %v620 = vld [vmem:[%s1 + $0x14] sm:$0xf]
        %v621 = vld [vmem:[%s1 + $0x18] sm:$0xf]
        %v622 = vld [vmem:[%s1 + $0x1c] sm:$0xf]
        %v623 = vld [vmem:[%s1 + $0x20] sm:$0xf]
        %v624 = vld [vmem:[%s1 + $0x24] sm:$0xf]
        %v625 = vld [vmem:[%s1 + $0x28] sm:$0xf]
        %v626 = vld [vmem:[%s1 + $0x2c] sm:$0xf]
        %v627 = vld [vmem:[%s1 + $0x30] sm:$0xf]
        %v628 = vld [vmem:[%s1 + $0x34] sm:$0xf]
        %v629 = vld [vmem:[%s1 + $0x38] sm:$0xf]
        %v630 = vld [vmem:[%s1 + $0x3c] sm:$0xf]
        %v631 = vld [vmem:[%s1 + $0x40] sm:$0xf]
        %v632 = vld [vmem:[%s1 + $0x44] sm:$0xf]
        %v633 = vld [vmem:[%s1 + $0x48] sm:$0xf]
        %v634 = vld [vmem:[%s1 + $0x4c] sm:$0xf]
        %v635 = vld [vmem:[%s1 + $0x50] sm:$0xf]
        %v636 = vld [vmem:[%s1 + $0x54] sm:$0xf]
        %v637 = vld [vmem:[%s1 + $0x58] sm:$0xf]
        %v638 = vld [vmem:[%s1 + $0x5c] sm:$0xf]
        %v639 = vld [vmem:[%s1 + $0x60] sm:$0xf]
        %v640 = vld [vmem:[%s1 + $0x64] sm:$0xf]
        %v641 = vld [vmem:[%s1 + $0x68] sm:$0xf]
        %v642 = vld [vmem:[%s1 + $0x6c] sm:$0xf]
        %v643 = vld [vmem:[%s1 + $0x70] sm:$0xf]
        %v644 = vld [vmem:[%s1 + $0x74] sm:$0xf]
        %v645 = vld [vmem:[%s1 + $0x78] sm:$0xf]
        %v646 = vld [vmem:[%s1 + $0x7c] sm:$0xf]
        %v647 = vld [vmem:[#allocation5] sm:$0x1]
        %v649 = vlaneseq
        %v650 = vshrl.u32 %v649, 7
        %v651 = vsub.s32 0, %v650
        %v652 = vrot.slane %v647, %v651
        %v686 = vunpack.c.l.b16 %v615
        %v687 = vunpack.c.l.b16 %v616
        %v688 = vunpack.c.l.b16 %v617
        %v689 = vunpack.c.l.b16 %v618
        %v690 = vunpack.c.l.b16 %v619
        %v691 = vunpack.c.l.b16 %v620
        %v692 = vunpack.c.l.b16 %v621
        %v693 = vunpack.c.l.b16 %v622
        %v694 = vunpack.c.l.b16 %v623
        %v695 = vunpack.c.l.b16 %v624
        %v696 = vunpack.c.l.b16 %v625
        %v697 = vunpack.c.l.b16 %v626
        %v698 = vunpack.c.l.b16 %v627
        %v699 = vunpack.c.l.b16 %v628
        %v700 = vunpack.c.l.b16 %v629
        %v701 = vunpack.c.l.b16 %v630
        %v702 = vunpack.c.l.b16 %v631
        %v703 = vunpack.c.l.b16 %v632
        %v704 = vunpack.c.l.b16 %v633
        %v705 = vunpack.c.l.b16 %v634
        %v706 = vunpack.c.l.b16 %v635
        %v707 = vunpack.c.l.b16 %v636
        %v708 = vunpack.c.l.b16 %v637
        %v709 = vunpack.c.l.b16 %v638
        %v710 = vunpack.c.l.b16 %v639
        %v711 = vunpack.c.l.b16 %v640
        %v712 = vunpack.c.l.b16 %v641
        %v713 = vunpack.c.l.b16 %v642
        %v714 = vunpack.c.l.b16 %v643
        %v715 = vunpack.c.l.b16 %v644
        %v716 = vunpack.c.l.b16 %v645
        %v717 = vunpack.c.l.b16 %v646
        %v718 = vpack.c.b16 %v687, %v686
        %v719 = vpack.c.b16 %v689, %v688
        %v720 = vpack.c.b16 %v691, %v690
        %v721 = vpack.c.b16 %v693, %v692
        %v722 = vpack.c.b16 %v695, %v694
        %v723 = vpack.c.b16 %v697, %v696
        %v724 = vpack.c.b16 %v699, %v698
        %v725 = vpack.c.b16 %v701, %v700
        %v726 = vpack.c.b16 %v703, %v702
        %v727 = vpack.c.b16 %v705, %v704
        %v728 = vpack.c.b16 %v707, %v706
        %v729 = vpack.c.b16 %v709, %v708
        %v730 = vpack.c.b16 %v711, %v710
        %v731 = vpack.c.b16 %v713, %v712
        %v732 = vpack.c.b16 %v715, %v714
        %v733 = vpack.c.b16 %v717, %v716
        %750 = vmatprep.subr.bf16.mxu0 0
        %751 = vmatpush1.bf16.msra.mxu0 %v718
        %752 = vmatprep.subr.bf16.mxu0 0
        %753 = vmatpush1.bf16.msra.mxu0 %v719
        %754 = vmatprep.subr.bf16.mxu0 0
        %755 = vmatpush1.bf16.msra.mxu0 %v720
        %756 = vmatprep.subr.bf16.mxu0 0
        %757 = vmatpush1.bf16.msra.mxu0 %v721
        %758 = vmatprep.subr.bf16.mxu0 0
        %759 = vmatpush1.bf16.msra.mxu0 %v722
        %760 = vmatprep.subr.bf16.mxu0 0
        %761 = vmatpush1.bf16.msra.mxu0 %v723
        %762 = vmatprep.subr.bf16.mxu0 0
        %763 = vmatpush1.bf16.msra.mxu0 %v724
        %764 = vmatprep.subr.bf16.mxu0 0
        %765 = vmatpush1.bf16.msra.mxu0 %v725
        %766 = vmatprep.subr.bf16.mxu0 0
        %767 = vmatpush1.bf16.msra.mxu0 %v726
        %768 = vmatprep.subr.bf16.mxu0 0
        %769 = vmatpush1.bf16.msra.mxu0 %v727
        %770 = vmatprep.subr.bf16.mxu0 0
        %771 = vmatpush1.bf16.msra.mxu0 %v728
        %772 = vmatprep.subr.bf16.mxu0 0
        %773 = vmatpush1.bf16.msra.mxu0 %v729
        %774 = vmatprep.subr.bf16.mxu0 0
        %775 = vmatpush1.bf16.msra.mxu0 %v730
        %776 = vmatprep.subr.bf16.mxu0 0
        %777 = vmatpush1.bf16.msra.mxu0 %v731
        %778 = vmatprep.subr.bf16.mxu0 0
        %779 = vmatpush1.bf16.msra.mxu0 %v732
        %780 = vmatprep.subr.bf16.mxu0 0
        %781 = vmatpush1.bf16.msra.mxu0 %v733
        %782 = vmatprep.mubr.bf16.mxu0 %v600
        %783 = vmatmul.mubr.bf16.gmra.mrb[0].mxu0 %v599
        %v784 = vpop.f32.mrb[0].mxu0
        %v785 = vadd.f32 %v652, %v784
        %v786 = vpop.f32.mrb[0].mxu0
        %v787 = vpop.f32.mrb[0].mxu0
        %v788 = vadd.f32 %v652, %v787
        %v789 = vpop.f32.mrb[0].mxu0
        %790 = vmatprep.mubr.bf16.mxu0 %v602
        %791 = vmatmul.mubr.bf16.gmra.mrb[0].mxu0 %v601
        %v792 = vpop.f32.mrb[0].mxu0
        %v793 = vadd.f32 %v652, %v792
        %v794 = vpop.f32.mrb[0].mxu0
        %v795 = vpop.f32.mrb[0].mxu0
        %v796 = vadd.f32 %v652, %v795
        %v797 = vpop.f32.mrb[0].mxu0
        %798 = vmatprep.mubr.bf16.mxu0 %v604
        %799 = vmatmul.mubr.bf16.gmra.mrb[0].mxu0 %v603
        %v800 = vpop.f32.mrb[0].mxu0
        %v801 = vadd.f32 %v652, %v800
        %v802 = vpop.f32.mrb[0].mxu0
        %v803 = vpop.f32.mrb[0].mxu0
        %v804 = vadd.f32 %v652, %v803
        %v805 = vpop.f32.mrb[0].mxu0
        %806 = vmatprep.mubr.bf16.mxu0 %v606
        %807 = vmatmul.mubr.bf16.gmra.mrb[0].mxu0 %v605
        %v808 = vpop.f32.mrb[0].mxu0
        %v809 = vadd.f32 %v652, %v808
        %v810 = vpop.f32.mrb[0].mxu0
        %v811 = vpop.f32.mrb[0].mxu0
        %v812 = vadd.f32 %v652, %v811
        %v813 = vpop.f32.mrb[0].mxu0
        %814 = vmatprep.mubr.bf16.mxu0 %v608
        %815 = vmatmul.mubr.bf16.gmra.mrb[0].mxu0 %v607
        %v816 = vpop.f32.mrb[0].mxu0
        %v817 = vadd.f32 %v652, %v816
        %v818 = vpop.f32.mrb[0].mxu0
        %v819 = vpop.f32.mrb[0].mxu0
        %v820 = vadd.f32 %v652, %v819
        %v821 = vpop.f32.mrb[0].mxu0
        %822 = vmatprep.mubr.bf16.mxu0 %v610
        %823 = vmatmul.mubr.bf16.gmra.mrb[0].mxu0 %v609
        %v824 = vpop.f32.mrb[0].mxu0
        %v825 = vadd.f32 %v652, %v824
        %v826 = vpop.f32.mrb[0].mxu0
        %v827 = vpop.f32.mrb[0].mxu0
        %v828 = vadd.f32 %v652, %v827
        %v829 = vpop.f32.mrb[0].mxu0
        %830 = vmatprep.mubr.bf16.mxu0 %v612
        %831 = vmatmul.mubr.bf16.gmra.mrb[0].mxu0 %v611
        %v832 = vpop.f32.mrb[0].mxu0
        %v833 = vadd.f32 %v652, %v832
        %v834 = vpop.f32.mrb[0].mxu0
        %v835 = vpop.f32.mrb[0].mxu0
        %v836 = vadd.f32 %v652, %v835
        %v837 = vpop.f32.mrb[0].mxu0
        %838 = vmatprep.mubr.bf16.mxu0 %v614
        %839 = vmatmul.mubr.bf16.gmra.mrb[0].mxu0 %v613
        %v840 = vpop.f32.mrb[0].mxu0
        %v841 = vadd.f32 %v652, %v840
        %v842 = vpop.f32.mrb[0].mxu0
        %v843 = vpop.f32.mrb[0].mxu0
        %v844 = vadd.f32 %v652, %v843
        %v845 = vpop.f32.mrb[0].mxu0
        %846 = vdwg.mxu0
        %v847 = vmax.f32 %v785, 0.0
        %v848 = vmax.f32 %v788, 0.0
        %v849 = vmax.f32 %v793, 0.0
        %v850 = vmax.f32 %v796, 0.0
        %v851 = vmax.f32 %v801, 0.0
        %v852 = vmax.f32 %v804, 0.0
        %v853 = vmax.f32 %v809, 0.0
        %v854 = vmax.f32 %v812, 0.0
        %v855 = vmax.f32 %v817, 0.0
        %v856 = vmax.f32 %v820, 0.0
        %v857 = vmax.f32 %v825, 0.0
        %v858 = vmax.f32 %v828, 0.0
        %v859 = vmax.f32 %v833, 0.0
        %v860 = vmax.f32 %v836, 0.0
        %v861 = vmax.f32 %v841, 0.0
        %v862 = vmax.f32 %v844, 0.0
        %v863 = vpack.c.bf16 %v848, %v847
        %v864 = vpack.c.bf16 %v850, %v849
        %v865 = vpack.c.bf16 %v852, %v851
        %v866 = vpack.c.bf16 %v854, %v853
        %v867 = vpack.c.bf16 %v856, %v855
        %v868 = vpack.c.bf16 %v858, %v857
        %v869 = vpack.c.bf16 %v860, %v859
        %v870 = vpack.c.bf16 %v862, %v861
        %v871 = vld [vmem:[%s3] sm:$0xf]
        %v872 = vld [vmem:[%s3 + $0x4] sm:$0xf]
        %v873 = vld [vmem:[%s3 + $0x8] sm:$0xf]
        %v874 = vld [vmem:[%s3 + $0xc] sm:$0xf]
        %v875 = vld [vmem:[%s3 + $0x10] sm:$0xf]
        %v876 = vld [vmem:[%s3 + $0x14] sm:$0xf]
        %v877 = vld [vmem:[%s3 + $0x18] sm:$0xf]
        %v878 = vld [vmem:[%s3 + $0x1c] sm:$0xf]
        %v879 = vld [vmem:[%s3 + $0x20] sm:$0xf]
        %v880 = vld [vmem:[%s3 + $0x24] sm:$0xf]
        %v881 = vld [vmem:[%s3 + $0x28] sm:$0xf]
        %v882 = vld [vmem:[%s3 + $0x2c] sm:$0xf]
        %v883 = vld [vmem:[%s3 + $0x30] sm:$0xf]
        %v884 = vld [vmem:[%s3 + $0x34] sm:$0xf]
        %v885 = vld [vmem:[%s3 + $0x38] sm:$0xf]
        %v886 = vld [vmem:[%s3 + $0x3c] sm:$0xf]
        %v887 = vld [vmem:[#allocation7] sm:$0x1]
        %v889 = vlaneseq
        %v890 = vshrl.u32 %v889, 7
        %v891 = vsub.s32 0, %v890
        %v892 = vrot.slane %v887, %v891
        %v910 = vunpack.c.l.b16 %v871
        %v911 = vunpack.c.l.b16 %v872
        %v912 = vunpack.c.l.b16 %v873
        %v913 = vunpack.c.l.b16 %v874
        %v914 = vunpack.c.l.b16 %v875
        %v915 = vunpack.c.l.b16 %v876
        %v916 = vunpack.c.l.b16 %v877
        %v917 = vunpack.c.l.b16 %v878
        %v918 = vunpack.c.l.b16 %v879
        %v919 = vunpack.c.l.b16 %v880
        %v920 = vunpack.c.l.b16 %v881
        %v921 = vunpack.c.l.b16 %v882
        %v922 = vunpack.c.l.b16 %v883
        %v923 = vunpack.c.l.b16 %v884
        %v924 = vunpack.c.l.b16 %v885
        %v925 = vunpack.c.l.b16 %v886
        %v926 = vpack.c.b16 %v911, %v910
        %v927 = vpack.c.b16 %v913, %v912
        %v928 = vpack.c.b16 %v915, %v914
        %v929 = vpack.c.b16 %v917, %v916
        %v930 = vpack.c.b16 %v919, %v918
        %v931 = vpack.c.b16 %v921, %v920
        %v932 = vpack.c.b16 %v923, %v922
        %v933 = vpack.c.b16 %v925, %v924
        %942 = vmatprep.subr.bf16.mxu0 0
        %943 = vmatpush1.bf16.msra.mxu0 %v926
        %944 = vmatprep.subr.bf16.mxu0 0
        %945 = vmatpush1.bf16.msra.mxu0 %v927
        %946 = vmatprep.subr.bf16.mxu0 0
        %947 = vmatpush1.bf16.msra.mxu0 %v928
        %948 = vmatprep.subr.bf16.mxu0 0
        %949 = vmatpush1.bf16.msra.mxu0 %v929
        %950 = vmatprep.subr.bf16.mxu0 0
        %951 = vmatpush1.bf16.msra.mxu0 %v930
        %952 = vmatprep.subr.bf16.mxu0 0
        %953 = vmatpush1.bf16.msra.mxu0 %v931
        %954 = vmatprep.subr.bf16.mxu0 0
        %955 = vmatpush1.bf16.msra.mxu0 %v932
        %956 = vmatprep.subr.bf16.mxu0 0
        %957 = vmatpush1.bf16.msra.mxu0 %v933
        %958 = vmatprep.subr.bf16.mxu0 0
        %959 = vmatpush1.bf16.msra.mxu0 0
        %960 = vmatprep.subr.bf16.mxu0 0
        %961 = vmatpush1.bf16.msra.mxu0 0
        %962 = vmatprep.subr.bf16.mxu0 0
        %963 = vmatpush1.bf16.msra.mxu0 0
        %964 = vmatprep.subr.bf16.mxu0 0
        %965 = vmatpush1.bf16.msra.mxu0 0
        %966 = vmatprep.subr.bf16.mxu0 0
        %967 = vmatpush1.bf16.msra.mxu0 0
        %968 = vmatprep.subr.bf16.mxu0 0
        %969 = vmatpush1.bf16.msra.mxu0 0
        %970 = vmatprep.subr.bf16.mxu0 0
        %971 = vmatpush1.bf16.msra.mxu0 0
        %972 = vmatprep.subr.bf16.mxu0 0
        %973 = vmatpush1.bf16.msra.mxu0 0
        %974 = vmatprep.mubr.bf16.mxu0 0
        %975 = vmatmul.mubr.bf16.gmra.mrb[0].mxu0 %v863
        %v976 = vpop.f32.mrb[0].mxu0
        %v977 = vadd.f32 %v892, %v976
        %v978 = vpop.f32.mrb[0].mxu0
        %v979 = vpop.f32.mrb[0].mxu0
        %v980 = vadd.f32 %v892, %v979
        %v981 = vpop.f32.mrb[0].mxu0
        %982 = vmatprep.mubr.bf16.mxu0 0
        %983 = vmatmul.mubr.bf16.gmra.mrb[0].mxu0 %v864
        %v984 = vpop.f32.mrb[0].mxu0
        %v985 = vadd.f32 %v892, %v984
        %v986 = vpop.f32.mrb[0].mxu0
        %v987 = vpop.f32.mrb[0].mxu0
        %v988 = vadd.f32 %v892, %v987
        %v989 = vpop.f32.mrb[0].mxu0
        %990 = vmatprep.mubr.bf16.mxu0 0
        %991 = vmatmul.mubr.bf16.gmra.mrb[0].mxu0 %v865
        %v992 = vpop.f32.mrb[0].mxu0
        %v993 = vadd.f32 %v892, %v992
        %v994 = vpop.f32.mrb[0].mxu0
        %v995 = vpop.f32.mrb[0].mxu0
        %v996 = vadd.f32 %v892, %v995
        %v997 = vpop.f32.mrb[0].mxu0
        %998 = vmatprep.mubr.bf16.mxu0 0
        %999 = vmatmul.mubr.bf16.gmra.mrb[0].mxu0 %v866
        %v1000 = vpop.f32.mrb[0].mxu0
        %v1001 = vadd.f32 %v892, %v1000
        %v1002 = vpop.f32.mrb[0].mxu0
        %v1003 = vpop.f32.mrb[0].mxu0
        %v1004 = vadd.f32 %v892, %v1003
        %v1005 = vpop.f32.mrb[0].mxu0
        %1006 = vmatprep.mubr.bf16.mxu0 0
        %1007 = vmatmul.mubr.bf16.gmra.mrb[0].mxu0 %v867
        %v1008 = vpop.f32.mrb[0].mxu0
        %v1009 = vadd.f32 %v892, %v1008
        %v1010 = vpop.f32.mrb[0].mxu0
        %v1011 = vpop.f32.mrb[0].mxu0
        %v1012 = vadd.f32 %v892, %v1011
        %v1013 = vpop.f32.mrb[0].mxu0
        %1014 = vmatprep.mubr.bf16.mxu0 0
        %1015 = vmatmul.mubr.bf16.gmra.mrb[0].mxu0 %v868
        %v1016 = vpop.f32.mrb[0].mxu0
        %v1017 = vadd.f32 %v892, %v1016
        %v1018 = vpop.f32.mrb[0].mxu0
        %v1019 = vpop.f32.mrb[0].mxu0
        %v1020 = vadd.f32 %v892, %v1019
        %v1021 = vpop.f32.mrb[0].mxu0
        %1022 = vmatprep.mubr.bf16.mxu0 0
        %1023 = vmatmul.mubr.bf16.gmra.mrb[0].mxu0 %v869
        %v1024 = vpop.f32.mrb[0].mxu0
        %v1025 = vadd.f32 %v892, %v1024
        %v1026 = vpop.f32.mrb[0].mxu0
        %v1027 = vpop.f32.mrb[0].mxu0
        %v1028 = vadd.f32 %v892, %v1027
        %v1029 = vpop.f32.mrb[0].mxu0
        %1030 = vmatprep.mubr.bf16.mxu0 0
        %1031 = vmatmul.mubr.bf16.gmra.mrb[0].mxu0 %v870
        %v1032 = vpop.f32.mrb[0].mxu0
        %v1033 = vadd.f32 %v892, %v1032
        %v1034 = vpop.f32.mrb[0].mxu0
        %v1035 = vpop.f32.mrb[0].mxu0
        %v1036 = vadd.f32 %v892, %v1035
        %v1037 = vpop.f32.mrb[0].mxu0
        %1038 = vdwg.mxu0
        %v1039 = vmax.f32 %v977, 0.0
        %v1040 = vmax.f32 %v980, 0.0
        %v1041 = vmax.f32 %v985, 0.0
        %v1042 = vmax.f32 %v988, 0.0
        %v1043 = vmax.f32 %v993, 0.0
        %v1044 = vmax.f32 %v996, 0.0
        %v1045 = vmax.f32 %v1001, 0.0
        %v1046 = vmax.f32 %v1004, 0.0
        %v1047 = vmax.f32 %v1009, 0.0
        %v1048 = vmax.f32 %v1012, 0.0
        %v1049 = vmax.f32 %v1017, 0.0
        %v1050 = vmax.f32 %v1020, 0.0
        %v1051 = vmax.f32 %v1025, 0.0
        %v1052 = vmax.f32 %v1028, 0.0
        %v1053 = vmax.f32 %v1033, 0.0
        %v1054 = vmax.f32 %v1036, 0.0
        %v1055 = vpack.c.bf16 %v1040, %v1039
        %v1056 = vpack.c.bf16 %v1042, %v1041
        %v1057 = vpack.c.bf16 %v1044, %v1043
        %v1058 = vpack.c.bf16 %v1046, %v1045
        %v1059 = vpack.c.bf16 %v1048, %v1047
        %v1060 = vpack.c.bf16 %v1050, %v1049
        %v1061 = vpack.c.bf16 %v1052, %v1051
        %v1062 = vpack.c.bf16 %v1054, %v1053
        %v1063 = vld [vmem:[%s5] sm:$0xf]
        %v1064 = vld [vmem:[%s5 + $0x4] sm:$0xf]
        %v1065 = vld [vmem:[%s5 + $0x8] sm:$0xf]
        %v1066 = vld [vmem:[%s5 + $0xc] sm:$0xf]
        %v1067 = vld [vmem:[%s5 + $0x10] sm:$0xf]
        %v1068 = vld [vmem:[%s5 + $0x14] sm:$0xf]
        %v1069 = vld [vmem:[%s5 + $0x18] sm:$0xf]
        %v1070 = vld [vmem:[%s5 + $0x1c] sm:$0xf]
        %v1071 = vld [vmem:[#allocation8] sm:$0x1]
        %v1073 = vlaneseq
        %v1074 = vshrl.u32 %v1073, 7
        %v1075 = vsub.s32 0, %v1074
        %v1076 = vrot.slane %v1071, %v1075
        %v1086 = vunpack.c.l.b16 %v1063
        %v1087 = vunpack.c.l.b16 %v1064
        %v1088 = vunpack.c.l.b16 %v1065
        %v1089 = vunpack.c.l.b16 %v1066
        %v1090 = vunpack.c.l.b16 %v1067
        %v1091 = vunpack.c.l.b16 %v1068
        %v1092 = vunpack.c.l.b16 %v1069
        %v1093 = vunpack.c.l.b16 %v1070
        %v1094 = vpack.c.b16 %v1087, %v1086
        %v1095 = vpack.c.b16 %v1089, %v1088
        %v1096 = vpack.c.b16 %v1091, %v1090
        %v1097 = vpack.c.b16 %v1093, %v1092
        %vm1102 = vcmask 523264
        %v1104 = vsel %vm1102, %v1055, 0
        %v1107 = vsel %vm1102, %v1056, 0
        %v1110 = vsel %vm1102, %v1057, 0
        %v1113 = vsel %vm1102, %v1058, 0
        %v1116 = vsel %vm1102, %v1059, 0
        %v1119 = vsel %vm1102, %v1060, 0
        %v1122 = vsel %vm1102, %v1061, 0
        %v1125 = vsel %vm1102, %v1062, 0
        %1127 = vmatprep.subr.bf16.mxu0 0
        %1128 = vmatpush1.bf16.msra.mxu0 %v1094
        %1129 = vmatprep.subr.bf16.mxu0 0
        %1130 = vmatpush1.bf16.msra.mxu0 %v1095
        %1131 = vmatprep.subr.bf16.mxu0 0
        %1132 = vmatpush1.bf16.msra.mxu0 %v1096
        %1133 = vmatprep.subr.bf16.mxu0 0
        %1134 = vmatpush1.bf16.msra.mxu0 %v1097
        %1135 = vmatprep.subr.bf16.mxu0 0
        %1136 = vmatpush1.bf16.msra.mxu0 0
        %1137 = vmatprep.subr.bf16.mxu0 0
        %1138 = vmatpush1.bf16.msra.mxu0 0
        %1139 = vmatprep.subr.bf16.mxu0 0
        %1140 = vmatpush1.bf16.msra.mxu0 0
        %1141 = vmatprep.subr.bf16.mxu0 0
        %1142 = vmatpush1.bf16.msra.mxu0 0
        %1143 = vmatprep.subr.bf16.mxu0 0
        %1144 = vmatpush1.bf16.msra.mxu0 0
        %1145 = vmatprep.subr.bf16.mxu0 0
        %1146 = vmatpush1.bf16.msra.mxu0 0
        %1147 = vmatprep.subr.bf16.mxu0 0
        %1148 = vmatpush1.bf16.msra.mxu0 0
        %1149 = vmatprep.subr.bf16.mxu0 0
        %1150 = vmatpush1.bf16.msra.mxu0 0
        %1151 = vmatprep.subr.bf16.mxu0 0
        %1152 = vmatpush1.bf16.msra.mxu0 0
        %1153 = vmatprep.subr.bf16.mxu0 0
        %1154 = vmatpush1.bf16.msra.mxu0 0
        %1155 = vmatprep.subr.bf16.mxu0 0
        %1156 = vmatpush1.bf16.msra.mxu0 0
        %1157 = vmatprep.subr.bf16.mxu0 0
        %1158 = vmatpush1.bf16.msra.mxu0 0
        %1159 = vmatprep.mubr.bf16.mxu0 0
        %1160 = vmatmul.mubr.bf16.gmra.mrb[0].mxu0 %v1104
        %v1161 = vpop.f32.mrb[0].mxu0
        %v1162 = vadd.f32 %v1076, %v1161
        %v1163 = vpop.f32.mrb[0].mxu0
        %v1164 = vpop.f32.mrb[0].mxu0
        %v1165 = vadd.f32 %v1076, %v1164
        %v1166 = vpop.f32.mrb[0].mxu0
        %1167 = vmatprep.mubr.bf16.mxu0 0
        %1168 = vmatmul.mubr.bf16.gmra.mrb[0].mxu0 %v1107
        %v1169 = vpop.f32.mrb[0].mxu0
        %v1170 = vadd.f32 %v1076, %v1169
        %v1171 = vpop.f32.mrb[0].mxu0
        %v1172 = vpop.f32.mrb[0].mxu0
        %v1173 = vadd.f32 %v1076, %v1172
        %v1174 = vpop.f32.mrb[0].mxu0
        %1175 = vmatprep.mubr.bf16.mxu0 0
        %1176 = vmatmul.mubr.bf16.gmra.mrb[0].mxu0 %v1110
        %v1177 = vpop.f32.mrb[0].mxu0
        %v1178 = vadd.f32 %v1076, %v1177
        %v1179 = vpop.f32.mrb[0].mxu0
        %v1180 = vpop.f32.mrb[0].mxu0
        %v1181 = vadd.f32 %v1076, %v1180
        %v1182 = vpop.f32.mrb[0].mxu0
        %1183 = vmatprep.mubr.bf16.mxu0 0
        %1184 = vmatmul.mubr.bf16.gmra.mrb[0].mxu0 %v1113
        %v1185 = vpop.f32.mrb[0].mxu0
        %v1186 = vadd.f32 %v1076, %v1185
        %v1187 = vpop.f32.mrb[0].mxu0
        %v1188 = vpop.f32.mrb[0].mxu0
        %v1189 = vadd.f32 %v1076, %v1188
        %v1190 = vpop.f32.mrb[0].mxu0
        %1191 = vmatprep.mubr.bf16.mxu0 0
        %1192 = vmatmul.mubr.bf16.gmra.mrb[0].mxu0 %v1116
        %v1193 = vpop.f32.mrb[0].mxu0
        %v1194 = vadd.f32 %v1076, %v1193
        %v1195 = vpop.f32.mrb[0].mxu0
        %v1196 = vpop.f32.mrb[0].mxu0
        %v1197 = vadd.f32 %v1076, %v1196
        %v1198 = vpop.f32.mrb[0].mxu0
        %1199 = vmatprep.mubr.bf16.mxu0 0
        %1200 = vmatmul.mubr.bf16.gmra.mrb[0].mxu0 %v1119
        %v1201 = vpop.f32.mrb[0].mxu0
        %v1202 = vadd.f32 %v1076, %v1201
        %v1203 = vpop.f32.mrb[0].mxu0
        %v1204 = vpop.f32.mrb[0].mxu0
        %v1205 = vadd.f32 %v1076, %v1204
        %v1206 = vpop.f32.mrb[0].mxu0
        %1207 = vmatprep.mubr.bf16.mxu0 0
        %1208 = vmatmul.mubr.bf16.gmra.mrb[0].mxu0 %v1122
        %v1209 = vpop.f32.mrb[0].mxu0
        %v1210 = vadd.f32 %v1076, %v1209
        %v1211 = vpop.f32.mrb[0].mxu0
        %v1212 = vpop.f32.mrb[0].mxu0
        %v1213 = vadd.f32 %v1076, %v1212
        %v1214 = vpop.f32.mrb[0].mxu0
        %1215 = vmatprep.mubr.bf16.mxu0 0
        %1216 = vmatmul.mubr.bf16.gmra.mrb[0].mxu0 %v1125
        %v1217 = vpop.f32.mrb[0].mxu0
        %v1218 = vadd.f32 %v1076, %v1217
        %v1219 = vpop.f32.mrb[0].mxu0
        %v1220 = vpop.f32.mrb[0].mxu0
        %v1221 = vadd.f32 %v1076, %v1220
        %v1222 = vpop.f32.mrb[0].mxu0
        %1223 = vdwg.mxu0
        %v1224 = vmax.f32 %v1162, 0.0
        %v1225 = vmax.f32 %v1165, 0.0
        %v1226 = vmax.f32 %v1170, 0.0
        %v1227 = vmax.f32 %v1173, 0.0
        %v1228 = vmax.f32 %v1178, 0.0
        %v1229 = vmax.f32 %v1181, 0.0
        %v1230 = vmax.f32 %v1186, 0.0
        %v1231 = vmax.f32 %v1189, 0.0
        %v1232 = vmax.f32 %v1194, 0.0
        %v1233 = vmax.f32 %v1197, 0.0
        %v1234 = vmax.f32 %v1202, 0.0
        %v1235 = vmax.f32 %v1205, 0.0
        %v1236 = vmax.f32 %v1210, 0.0
        %v1237 = vmax.f32 %v1213, 0.0
        %v1238 = vmax.f32 %v1218, 0.0
        %v1239 = vmax.f32 %v1221, 0.0
        %1240 = vst [vmem:[%s555] sm:$0xff] %v1224
        %1241 = vst [vmem:[%s555 + $0x8] sm:$0xff] %v1225
        %1242 = vst [vmem:[%s555 + $0x10] sm:$0xff] %v1226
        %1243 = vst [vmem:[%s555 + $0x18] sm:$0xff] %v1227
        %1244 = vst [vmem:[%s555 + $0x20] sm:$0xff] %v1228
        %1245 = vst [vmem:[%s555 + $0x28] sm:$0xff] %v1229
        %1246 = vst [vmem:[%s555 + $0x30] sm:$0xff] %v1230
        %1247 = vst [vmem:[%s555 + $0x38] sm:$0xff] %v1231
        %1248 = vst [vmem:[%s555 + $0x40] sm:$0xff] %v1232
        %1249 = vst [vmem:[%s555 + $0x48] sm:$0xff] %v1233
        %1250 = vst [vmem:[%s555 + $0x50] sm:$0xff] %v1234
        %1251 = vst [vmem:[%s555 + $0x58] sm:$0xff] %v1235
        %1252 = vst [vmem:[%s555 + $0x60] sm:$0xff] %v1236
        %1253 = vst [vmem:[%s555 + $0x68] sm:$0xff] %v1237
        %1254 = vst [vmem:[%s555 + $0x70] sm:$0xff] %v1238
        %1255 = vst [vmem:[%s555 + $0x78] sm:$0xff] %v1239
        %v1256 = vpack.c.bf16 %v1225, %v1224
        %v1257 = vpack.c.bf16 %v1227, %v1226
        %v1258 = vpack.c.bf16 %v1229, %v1228
        %v1259 = vpack.c.bf16 %v1231, %v1230
        %v1260 = vpack.c.bf16 %v1233, %v1232
        %v1261 = vpack.c.bf16 %v1235, %v1234
        %v1262 = vpack.c.bf16 %v1237, %v1236
        %v1263 = vpack.c.bf16 %v1239, %v1238
        %v1264 = vld [vmem:[%s7] sm:$0xf]
        %v1265 = vld [vmem:[%s7 + $0x4] sm:$0xf]
        %v1266 = vld [vmem:[%s7 + $0x8] sm:$0xf]
        %v1267 = vld [vmem:[%s7 + $0xc] sm:$0xf]
        %v1268 = vld [vmem:[%s7 + $0x10] sm:$0xf]
        %v1269 = vld [vmem:[%s7 + $0x14] sm:$0xf]
        %v1270 = vld [vmem:[%s7 + $0x18] sm:$0xf]
        %v1271 = vld [vmem:[%s7 + $0x1c] sm:$0xf]
        %v1272 = vld [vmem:[%s7 + $0x20] sm:$0xf]
        %v1273 = vld [vmem:[%s7 + $0x24] sm:$0xf]
        %v1274 = vld [vmem:[%s7 + $0x28] sm:$0xf]
        %v1275 = vld [vmem:[%s7 + $0x2c] sm:$0xf]
        %v1276 = vld [vmem:[%s7 + $0x30] sm:$0xf]
        %v1277 = vld [vmem:[%s7 + $0x34] sm:$0xf]
        %v1278 = vld [vmem:[%s7 + $0x38] sm:$0xf]
        %v1279 = vld [vmem:[%s7 + $0x3c] sm:$0xf]
        %v1280 = vld [vmem:[#allocation10] sm:$0x1]
        %v1282 = vlaneseq
        %v1283 = vshrl.u32 %v1282, 7
        %v1284 = vsub.s32 0, %v1283
        %v1285 = vrot.slane %v1280, %v1284
        %v1303 = vunpack.c.l.b16 %v1264
        %v1304 = vunpack.c.l.b16 %v1265
        %v1305 = vunpack.c.l.b16 %v1266
        %v1306 = vunpack.c.l.b16 %v1267
        %v1307 = vunpack.c.l.b16 %v1268
        %v1308 = vunpack.c.l.b16 %v1269
        %v1309 = vunpack.c.l.b16 %v1270
        %v1310 = vunpack.c.l.b16 %v1271
        %v1311 = vunpack.c.l.b16 %v1272
        %v1312 = vunpack.c.l.b16 %v1273
        %v1313 = vunpack.c.l.b16 %v1274
        %v1314 = vunpack.c.l.b16 %v1275
        %v1315 = vunpack.c.l.b16 %v1276
        %v1316 = vunpack.c.l.b16 %v1277
        %v1317 = vunpack.c.l.b16 %v1278
        %v1318 = vunpack.c.l.b16 %v1279
        %v1319 = vpack.c.b16 %v1304, %v1303
        %v1320 = vpack.c.b16 %v1306, %v1305
        %v1321 = vpack.c.b16 %v1308, %v1307
        %v1322 = vpack.c.b16 %v1310, %v1309
        %v1323 = vpack.c.b16 %v1312, %v1311
        %v1324 = vpack.c.b16 %v1314, %v1313
        %v1325 = vpack.c.b16 %v1316, %v1315
        %v1326 = vpack.c.b16 %v1318, %v1317
        %1335 = vmatprep.subr.bf16.mxu0 0
        %1336 = vmatpush1.bf16.msra.mxu0 %v1319
        %1337 = vmatprep.subr.bf16.mxu0 0
        %1338 = vmatpush1.bf16.msra.mxu0 %v1320
        %1339 = vmatprep.subr.bf16.mxu0 0
        %1340 = vmatpush1.bf16.msra.mxu0 %v1321
        %1341 = vmatprep.subr.bf16.mxu0 0
        %1342 = vmatpush1.bf16.msra.mxu0 %v1322
        %1343 = vmatprep.subr.bf16.mxu0 0
        %1344 = vmatpush1.bf16.msra.mxu0 %v1323
        %1345 = vmatprep.subr.bf16.mxu0 0
        %1346 = vmatpush1.bf16.msra.mxu0 %v1324
        %1347 = vmatprep.subr.bf16.mxu0 0
        %1348 = vmatpush1.bf16.msra.mxu0 %v1325
        %1349 = vmatprep.subr.bf16.mxu0 0
        %1350 = vmatpush1.bf16.msra.mxu0 %v1326
        %1351 = vmatprep.subr.bf16.mxu0 0
        %1352 = vmatpush1.bf16.msra.mxu0 0
        %1353 = vmatprep.subr.bf16.mxu0 0
        %1354 = vmatpush1.bf16.msra.mxu0 0
        %1355 = vmatprep.subr.bf16.mxu0 0
        %1356 = vmatpush1.bf16.msra.mxu0 0
        %1357 = vmatprep.subr.bf16.mxu0 0
        %1358 = vmatpush1.bf16.msra.mxu0 0
        %1359 = vmatprep.subr.bf16.mxu0 0
        %1360 = vmatpush1.bf16.msra.mxu0 0
        %1361 = vmatprep.subr.bf16.mxu0 0
        %1362 = vmatpush1.bf16.msra.mxu0 0
        %1363 = vmatprep.subr.bf16.mxu0 0
        %1364 = vmatpush1.bf16.msra.mxu0 0
        %1365 = vmatprep.subr.bf16.mxu0 0
        %1366 = vmatpush1.bf16.msra.mxu0 0
        %1367 = vmatprep.mubr.bf16.mxu0 0
        %1368 = vmatmul.mubr.bf16.gmra.mrb[0].mxu0 %v1256
        %v1369 = vpop.f32.mrb[0].mxu0
        %v1370 = vadd.f32 %v1285, %v1369
        %v1371 = vpop.f32.mrb[0].mxu0
        %v1372 = vpop.f32.mrb[0].mxu0
        %v1373 = vadd.f32 %v1285, %v1372
        %v1374 = vpop.f32.mrb[0].mxu0
        %1375 = vmatprep.mubr.bf16.mxu0 0
        %1376 = vmatmul.mubr.bf16.gmra.mrb[0].mxu0 %v1257
        %v1377 = vpop.f32.mrb[0].mxu0
        %v1378 = vadd.f32 %v1285, %v1377
        %v1379 = vpop.f32.mrb[0].mxu0
        %v1380 = vpop.f32.mrb[0].mxu0
        %v1381 = vadd.f32 %v1285, %v1380
        %v1382 = vpop.f32.mrb[0].mxu0
        %1383 = vmatprep.mubr.bf16.mxu0 0
        %1384 = vmatmul.mubr.bf16.gmra.mrb[0].mxu0 %v1258
        %v1385 = vpop.f32.mrb[0].mxu0
        %v1386 = vadd.f32 %v1285, %v1385
        %v1387 = vpop.f32.mrb[0].mxu0
        %v1388 = vpop.f32.mrb[0].mxu0
        %v1389 = vadd.f32 %v1285, %v1388
        %v1390 = vpop.f32.mrb[0].mxu0
        %1391 = vmatprep.mubr.bf16.mxu0 0
        %1392 = vmatmul.mubr.bf16.gmra.mrb[0].mxu0 %v1259
        %v1393 = vpop.f32.mrb[0].mxu0
        %v1394 = vadd.f32 %v1285, %v1393
        %v1395 = vpop.f32.mrb[0].mxu0
        %v1396 = vpop.f32.mrb[0].mxu0
        %v1397 = vadd.f32 %v1285, %v1396
        %v1398 = vpop.f32.mrb[0].mxu0
        %1399 = vmatprep.mubr.bf16.mxu0 0
        %1400 = vmatmul.mubr.bf16.gmra.mrb[0].mxu0 %v1260
        %v1401 = vpop.f32.mrb[0].mxu0
        %v1402 = vadd.f32 %v1285, %v1401
        %v1403 = vpop.f32.mrb[0].mxu0
        %v1404 = vpop.f32.mrb[0].mxu0
        %v1405 = vadd.f32 %v1285, %v1404
        %v1406 = vpop.f32.mrb[0].mxu0
        %1407 = vmatprep.mubr.bf16.mxu0 0
        %1408 = vmatmul.mubr.bf16.gmra.mrb[0].mxu0 %v1261
        %v1409 = vpop.f32.mrb[0].mxu0
        %v1410 = vadd.f32 %v1285, %v1409
        %v1411 = vpop.f32.mrb[0].mxu0
        %v1412 = vpop.f32.mrb[0].mxu0
        %v1413 = vadd.f32 %v1285, %v1412
        %v1414 = vpop.f32.mrb[0].mxu0
        %1415 = vmatprep.mubr.bf16.mxu0 0
        %1416 = vmatmul.mubr.bf16.gmra.mrb[0].mxu0 %v1262
        %v1417 = vpop.f32.mrb[0].mxu0
        %v1418 = vadd.f32 %v1285, %v1417
        %v1419 = vpop.f32.mrb[0].mxu0
        %v1420 = vpop.f32.mrb[0].mxu0
        %v1421 = vadd.f32 %v1285, %v1420
        %v1422 = vpop.f32.mrb[0].mxu0
        %1423 = vmatprep.mubr.bf16.mxu0 0
        %1424 = vmatmul.mubr.bf16.gmra.mrb[0].mxu0 %v1263
        %v1425 = vpop.f32.mrb[0].mxu0
        %v1426 = vadd.f32 %v1285, %v1425
        %v1427 = vpop.f32.mrb[0].mxu0
        %v1428 = vpop.f32.mrb[0].mxu0
        %v1429 = vadd.f32 %v1285, %v1428
        %v1430 = vpop.f32.mrb[0].mxu0
        %1431 = vdwg.mxu0
        %v1432 = vmax.f32 %v1370, 0.0
        %v1433 = vmax.f32 %v1373, 0.0
        %v1434 = vmax.f32 %v1378, 0.0
        %v1435 = vmax.f32 %v1381, 0.0
        %v1436 = vmax.f32 %v1386, 0.0
        %v1437 = vmax.f32 %v1389, 0.0
        %v1438 = vmax.f32 %v1394, 0.0
        %v1439 = vmax.f32 %v1397, 0.0
        %v1440 = vmax.f32 %v1402, 0.0
        %v1441 = vmax.f32 %v1405, 0.0
        %v1442 = vmax.f32 %v1410, 0.0
        %v1443 = vmax.f32 %v1413, 0.0
        %v1444 = vmax.f32 %v1418, 0.0
        %v1445 = vmax.f32 %v1421, 0.0
        %v1446 = vmax.f32 %v1426, 0.0
        %v1447 = vmax.f32 %v1429, 0.0
        %v1448 = vpack.c.bf16 %v1433, %v1432
        %v1449 = vpack.c.bf16 %v1435, %v1434
        %v1450 = vpack.c.bf16 %v1437, %v1436
        %v1451 = vpack.c.bf16 %v1439, %v1438
        %v1452 = vpack.c.bf16 %v1441, %v1440
        %v1453 = vpack.c.bf16 %v1443, %v1442
        %v1454 = vpack.c.bf16 %v1445, %v1444
        %v1455 = vpack.c.bf16 %v1447, %v1446
        %v1456 = vld [vmem:[%s9] sm:$0xf]
        %v1457 = vld [vmem:[%s9 + $0x4] sm:$0xf]
        %v1458 = vld [vmem:[%s9 + $0x8] sm:$0xf]
        %v1459 = vld [vmem:[%s9 + $0xc] sm:$0xf]
        %v1460 = vld [vmem:[%s9 + $0x10] sm:$0xf]
        %v1461 = vld [vmem:[%s9 + $0x14] sm:$0xf]
        %v1462 = vld [vmem:[%s9 + $0x18] sm:$0xf]
        %v1463 = vld [vmem:[%s9 + $0x1c] sm:$0xf]
        %v1464 = vld [vmem:[%s10] sm:$0x1]
        %v1466 = vlaneseq
        %v1467 = vshrl.u32 %v1466, 7
        %v1468 = vsub.s32 0, %v1467
        %v1469 = vrot.slane %v1464, %v1468
        %v1479 = vunpack.c.l.b16 %v1456
        %v1480 = vunpack.c.l.b16 %v1457
        %v1481 = vunpack.c.l.b16 %v1458
        %v1482 = vunpack.c.l.b16 %v1459
        %v1483 = vunpack.c.l.b16 %v1460
        %v1484 = vunpack.c.l.b16 %v1461
        %v1485 = vunpack.c.l.b16 %v1462
        %v1486 = vunpack.c.l.b16 %v1463
        %v1487 = vpack.c.b16 %v1480, %v1479
        %v1488 = vpack.c.b16 %v1482, %v1481
        %v1489 = vpack.c.b16 %v1484, %v1483
        %v1490 = vpack.c.b16 %v1486, %v1485
        %v1496 = vsel %vm1102, %v1448, 0
        %v1499 = vsel %vm1102, %v1449, 0
        %v1502 = vsel %vm1102, %v1450, 0
        %v1505 = vsel %vm1102, %v1451, 0
        %v1508 = vsel %vm1102, %v1452, 0
        %v1511 = vsel %vm1102, %v1453, 0
        %v1514 = vsel %vm1102, %v1454, 0
        %v1517 = vsel %vm1102, %v1455, 0
        %1519 = vmatprep.subr.bf16.mxu0 0
        %1520 = vmatpush1.bf16.msra.mxu0 %v1487
        %1521 = vmatprep.subr.bf16.mxu0 0
        %1522 = vmatpush1.bf16.msra.mxu0 %v1488
        %1523 = vmatprep.subr.bf16.mxu0 0
        %1524 = vmatpush1.bf16.msra.mxu0 %v1489
        %1525 = vmatprep.subr.bf16.mxu0 0
        %1526 = vmatpush1.bf16.msra.mxu0 %v1490
        %1527 = vmatprep.subr.bf16.mxu0 0
        %1528 = vmatpush1.bf16.msra.mxu0 0
        %1529 = vmatprep.subr.bf16.mxu0 0
        %1530 = vmatpush1.bf16.msra.mxu0 0
        %1531 = vmatprep.subr.bf16.mxu0 0
        %1532 = vmatpush1.bf16.msra.mxu0 0
        %1533 = vmatprep.subr.bf16.mxu0 0
        %1534 = vmatpush1.bf16.msra.mxu0 0
        %1535 = vmatprep.subr.bf16.mxu0 0
        %1536 = vmatpush1.bf16.msra.mxu0 0
        %1537 = vmatprep.subr.bf16.mxu0 0
        %1538 = vmatpush1.bf16.msra.mxu0 0
        %1539 = vmatprep.subr.bf16.mxu0 0
        %1540 = vmatpush1.bf16.msra.mxu0 0
        %1541 = vmatprep.subr.bf16.mxu0 0
        %1542 = vmatpush1.bf16.msra.mxu0 0
        %1543 = vmatprep.subr.bf16.mxu0 0
        %1544 = vmatpush1.bf16.msra.mxu0 0
        %1545 = vmatprep.subr.bf16.mxu0 0
        %1546 = vmatpush1.bf16.msra.mxu0 0
        %1547 = vmatprep.subr.bf16.mxu0 0
        %1548 = vmatpush1.bf16.msra.mxu0 0
        %1549 = vmatprep.subr.bf16.mxu0 0
        %1550 = vmatpush1.bf16.msra.mxu0 0
        %1551 = vmatprep.mubr.bf16.mxu0 0
        %1552 = vmatmul.mubr.bf16.gmra.mrb[0].mxu0 %v1496
        %v1553 = vpop.f32.mrb[0].mxu0
        %v1554 = vadd.f32 %v1469, %v1553
        %v1555 = vpop.f32.mrb[0].mxu0
        %v1556 = vpop.f32.mrb[0].mxu0
        %v1557 = vadd.f32 %v1469, %v1556
        %v1558 = vpop.f32.mrb[0].mxu0
        %1559 = vmatprep.mubr.bf16.mxu0 0
        %1560 = vmatmul.mubr.bf16.gmra.mrb[0].mxu0 %v1499
        %v1561 = vpop.f32.mrb[0].mxu0
        %v1562 = vadd.f32 %v1469, %v1561
        %v1563 = vpop.f32.mrb[0].mxu0
        %v1564 = vpop.f32.mrb[0].mxu0
        %v1565 = vadd.f32 %v1469, %v1564
        %v1566 = vpop.f32.mrb[0].mxu0
        %1567 = vmatprep.mubr.bf16.mxu0 0
        %1568 = vmatmul.mubr.bf16.gmra.mrb[0].mxu0 %v1502
        %v1569 = vpop.f32.mrb[0].mxu0
        %v1570 = vadd.f32 %v1469, %v1569
        %v1571 = vpop.f32.mrb[0].mxu0
        %v1572 = vpop.f32.mrb[0].mxu0
        %v1573 = vadd.f32 %v1469, %v1572
        %v1574 = vpop.f32.mrb[0].mxu0
        %1575 = vmatprep.mubr.bf16.mxu0 0
        %1576 = vmatmul.mubr.bf16.gmra.mrb[0].mxu0 %v1505
        %v1577 = vpop.f32.mrb[0].mxu0
        %v1578 = vadd.f32 %v1469, %v1577
        %v1579 = vpop.f32.mrb[0].mxu0
        %v1580 = vpop.f32.mrb[0].mxu0
        %v1581 = vadd.f32 %v1469, %v1580
        %v1582 = vpop.f32.mrb[0].mxu0
        %1583 = vmatprep.mubr.bf16.mxu0 0
        %1584 = vmatmul.mubr.bf16.gmra.mrb[0].mxu0 %v1508
        %v1585 = vpop.f32.mrb[0].mxu0
        %v1586 = vadd.f32 %v1469, %v1585
        %v1587 = vpop.f32.mrb[0].mxu0
        %v1588 = vpop.f32.mrb[0].mxu0
        %v1589 = vadd.f32 %v1469, %v1588
        %v1590 = vpop.f32.mrb[0].mxu0
        %1591 = vmatprep.mubr.bf16.mxu0 0
        %1592 = vmatmul.mubr.bf16.gmra.mrb[0].mxu0 %v1511
        %v1593 = vpop.f32.mrb[0].mxu0
        %v1594 = vadd.f32 %v1469, %v1593
        %v1595 = vpop.f32.mrb[0].mxu0
        %v1596 = vpop.f32.mrb[0].mxu0
        %v1597 = vadd.f32 %v1469, %v1596
        %v1598 = vpop.f32.mrb[0].mxu0
        %1599 = vmatprep.mubr.bf16.mxu0 0
        %1600 = vmatmul.mubr.bf16.gmra.mrb[0].mxu0 %v1514
        %v1601 = vpop.f32.mrb[0].mxu0
        %v1602 = vadd.f32 %v1469, %v1601
        %v1603 = vpop.f32.mrb[0].mxu0
        %v1604 = vpop.f32.mrb[0].mxu0
        %v1605 = vadd.f32 %v1469, %v1604
        %v1606 = vpop.f32.mrb[0].mxu0
        %1607 = vmatprep.mubr.bf16.mxu0 0
        %1608 = vmatmul.mubr.bf16.gmra.mrb[0].mxu0 %v1517
        %v1609 = vpop.f32.mrb[0].mxu0
        %v1610 = vadd.f32 %v1469, %v1609
        %v1611 = vpop.f32.mrb[0].mxu0
        %v1612 = vpop.f32.mrb[0].mxu0
        %v1613 = vadd.f32 %v1469, %v1612
        %v1614 = vpop.f32.mrb[0].mxu0
        %1615 = vdwg.mxu0
        %v1616 = vmax.f32 %v1554, 0.0
        %v1617 = vmax.f32 %v1557, 0.0
        %v1618 = vmax.f32 %v1562, 0.0
        %v1619 = vmax.f32 %v1565, 0.0
        %v1620 = vmax.f32 %v1570, 0.0
        %v1621 = vmax.f32 %v1573, 0.0
        %v1622 = vmax.f32 %v1578, 0.0
        %v1623 = vmax.f32 %v1581, 0.0
        %v1624 = vmax.f32 %v1586, 0.0
        %v1625 = vmax.f32 %v1589, 0.0
        %v1626 = vmax.f32 %v1594, 0.0
        %v1627 = vmax.f32 %v1597, 0.0
        %v1628 = vmax.f32 %v1602, 0.0
        %v1629 = vmax.f32 %v1605, 0.0
        %v1630 = vmax.f32 %v1610, 0.0
        %v1631 = vmax.f32 %v1613, 0.0
        %v1632 = vpack.c.bf16 %v1617, %v1616
        %v1633 = vpack.c.bf16 %v1619, %v1618
        %v1634 = vpack.c.bf16 %v1621, %v1620
        %v1635 = vpack.c.bf16 %v1623, %v1622
        %v1636 = vpack.c.bf16 %v1625, %v1624
        %v1637 = vpack.c.bf16 %v1627, %v1626
        %v1638 = vpack.c.bf16 %v1629, %v1628
        %v1639 = vpack.c.bf16 %v1631, %v1630
        %v1640 = vld [vmem:[#allocation11] sm:$0xff]
        %v1641 = vld [vmem:[#allocation11 + $0x8] sm:$0xff]
        %v1642 = vld [vmem:[#allocation11 + $0x10] sm:$0xff]
        %v1643 = vld [vmem:[#allocation11 + $0x18] sm:$0xff]
        %v1644 = vld [vmem:[#allocation11 + $0x20] sm:$0xff]
        %v1645 = vld [vmem:[#allocation11 + $0x28] sm:$0xff]
        %v1646 = vld [vmem:[#allocation11 + $0x30] sm:$0xff]
        %v1647 = vld [vmem:[#allocation11 + $0x38] sm:$0xff]
        %v1648 = vld [vmem:[#allocation11 + $0x40] sm:$0xff]
        %v1649 = vld [vmem:[#allocation11 + $0x48] sm:$0xff]
        %v1650 = vld [vmem:[#allocation11 + $0x50] sm:$0xff]
        %v1651 = vld [vmem:[#allocation11 + $0x58] sm:$0xff]
        %v1652 = vld [vmem:[#allocation11 + $0x60] sm:$0xff]
        %v1653 = vld [vmem:[#allocation11 + $0x68] sm:$0xff]
        %v1654 = vld [vmem:[#allocation11 + $0x70] sm:$0xff]
        %v1655 = vld [vmem:[#allocation11 + $0x78] sm:$0xff]
        %v1656 = vld [vmem:[%s12] sm:$0x3]
        %v1658 = vlaneseq
        %v1659 = vshrl.u32 %v1658, 7
        %v1660 = vsub.s32 0, %v1659
        %v1661 = vrot.slane %v1656, %v1660
        %v1662 = vlaneseq
        %v1663 = vshrl.u32 %v1662, 7
        %v1664 = vsub.s32 1, %v1663
        %v1665 = vrot.slane %v1656, %v1664
        %v1684 = vunpack.c.l.b16 %v1640
        %v1685 = vunpack.c.h.b16 %v1640
        %v1686 = vunpack.c.l.b16 %v1641
        %v1687 = vunpack.c.h.b16 %v1641
        %v1688 = vunpack.c.l.b16 %v1642
        %v1689 = vunpack.c.h.b16 %v1642
        %v1690 = vunpack.c.l.b16 %v1643
        %v1691 = vunpack.c.h.b16 %v1643
        %v1692 = vunpack.c.l.b16 %v1644
        %v1693 = vunpack.c.h.b16 %v1644
        %v1694 = vunpack.c.l.b16 %v1645
        %v1695 = vunpack.c.h.b16 %v1645
        %v1696 = vunpack.c.l.b16 %v1646
        %v1697 = vunpack.c.h.b16 %v1646
        %v1698 = vunpack.c.l.b16 %v1647
        %v1699 = vunpack.c.h.b16 %v1647
        %v1700 = vunpack.c.l.b16 %v1648
        %v1701 = vunpack.c.h.b16 %v1648
        %v1702 = vunpack.c.l.b16 %v1649
        %v1703 = vunpack.c.h.b16 %v1649
        %v1704 = vunpack.c.l.b16 %v1650
        %v1705 = vunpack.c.h.b16 %v1650
        %v1706 = vunpack.c.l.b16 %v1651
        %v1707 = vunpack.c.h.b16 %v1651
        %v1708 = vunpack.c.l.b16 %v1652
        %v1709 = vunpack.c.h.b16 %v1652
        %v1710 = vunpack.c.l.b16 %v1653
        %v1711 = vunpack.c.h.b16 %v1653
        %v1712 = vunpack.c.l.b16 %v1654
        %v1713 = vunpack.c.h.b16 %v1654
        %v1714 = vunpack.c.l.b16 %v1655
        %v1715 = vunpack.c.h.b16 %v1655
        %v1716 = vpack.c.b16 %v1686, %v1684
        %v1717 = vpack.c.b16 %v1687, %v1685
        %v1718 = vpack.c.b16 %v1690, %v1688
        %v1719 = vpack.c.b16 %v1691, %v1689
        %v1720 = vpack.c.b16 %v1694, %v1692
        %v1721 = vpack.c.b16 %v1695, %v1693
        %v1722 = vpack.c.b16 %v1698, %v1696
        %v1723 = vpack.c.b16 %v1699, %v1697
        %v1724 = vpack.c.b16 %v1702, %v1700
        %v1725 = vpack.c.b16 %v1703, %v1701
        %v1726 = vpack.c.b16 %v1706, %v1704
        %v1727 = vpack.c.b16 %v1707, %v1705
        %v1728 = vpack.c.b16 %v1710, %v1708
        %v1729 = vpack.c.b16 %v1711, %v1709
        %v1730 = vpack.c.b16 %v1714, %v1712
        %v1731 = vpack.c.b16 %v1715, %v1713
        %1748 = vmatprep.subr.bf16.mxu0 %v1717
        %1749 = vmatpush1.bf16.msra.mxu0 %v1716
        %1750 = vmatprep.subr.bf16.mxu0 %v1719
        %1751 = vmatpush1.bf16.msra.mxu0 %v1718
        %1752 = vmatprep.subr.bf16.mxu0 %v1721
        %1753 = vmatpush1.bf16.msra.mxu0 %v1720
        %1754 = vmatprep.subr.bf16.mxu0 %v1723
        %1755 = vmatpush1.bf16.msra.mxu0 %v1722
        %1756 = vmatprep.subr.bf16.mxu0 %v1725
        %1757 = vmatpush1.bf16.msra.mxu0 %v1724
        %1758 = vmatprep.subr.bf16.mxu0 %v1727
        %1759 = vmatpush1.bf16.msra.mxu0 %v1726
        %1760 = vmatprep.subr.bf16.mxu0 %v1729
        %1761 = vmatpush1.bf16.msra.mxu0 %v1728
        %1762 = vmatprep.subr.bf16.mxu0 %v1731
        %1763 = vmatpush1.bf16.msra.mxu0 %v1730
        %1764 = vmatprep.subr.bf16.mxu0 0
        %1765 = vmatpush1.bf16.msra.mxu0 0
        %1766 = vmatprep.subr.bf16.mxu0 0
        %1767 = vmatpush1.bf16.msra.mxu0 0
        %1768 = vmatprep.subr.bf16.mxu0 0
        %1769 = vmatpush1.bf16.msra.mxu0 0
        %1770 = vmatprep.subr.bf16.mxu0 0
        %1771 = vmatpush1.bf16.msra.mxu0 0
        %1772 = vmatprep.subr.bf16.mxu0 0
        %1773 = vmatpush1.bf16.msra.mxu0 0
        %1774 = vmatprep.subr.bf16.mxu0 0
        %1775 = vmatpush1.bf16.msra.mxu0 0
        %1776 = vmatprep.subr.bf16.mxu0 0
        %1777 = vmatpush1.bf16.msra.mxu0 0
        %1778 = vmatprep.subr.bf16.mxu0 0
        %1779 = vmatpush1.bf16.msra.mxu0 0
        %1780 = vmatprep.mubr.bf16.mxu0 0
        %1781 = vmatmul.mubr.bf16.gmra.mrb[0].mxu0 %v1632
        %v1782 = vpop.f32.mrb[0].mxu0
        %v1783 = vadd.f32 %v1661, %v1782
        %v1784 = vpop.f32.mrb[0].mxu0
        %v1785 = vadd.f32 %v1665, %v1784
        %v1786 = vpop.f32.mrb[0].mxu0
        %v1787 = vadd.f32 %v1661, %v1786
        %v1788 = vpop.f32.mrb[0].mxu0
        %v1789 = vadd.f32 %v1665, %v1788
        %1790 = vmatprep.mubr.bf16.mxu0 0
        %1791 = vmatmul.mubr.bf16.gmra.mrb[0].mxu0 %v1633
        %v1792 = vpop.f32.mrb[0].mxu0
        %v1793 = vadd.f32 %v1661, %v1792
        %v1794 = vpop.f32.mrb[0].mxu0
        %v1795 = vadd.f32 %v1665, %v1794
        %v1796 = vpop.f32.mrb[0].mxu0
        %v1797 = vadd.f32 %v1661, %v1796
        %v1798 = vpop.f32.mrb[0].mxu0
        %v1799 = vadd.f32 %v1665, %v1798
        %1800 = vmatprep.mubr.bf16.mxu0 0
        %1801 = vmatmul.mubr.bf16.gmra.mrb[0].mxu0 %v1634
        %v1802 = vpop.f32.mrb[0].mxu0
        %v1803 = vadd.f32 %v1661, %v1802
        %v1804 = vpop.f32.mrb[0].mxu0
        %v1805 = vadd.f32 %v1665, %v1804
        %v1806 = vpop.f32.mrb[0].mxu0
        %v1807 = vadd.f32 %v1661, %v1806
        %v1808 = vpop.f32.mrb[0].mxu0
        %v1809 = vadd.f32 %v1665, %v1808
        %1810 = vmatprep.mubr.bf16.mxu0 0
        %1811 = vmatmul.mubr.bf16.gmra.mrb[0].mxu0 %v1635
        %v1812 = vpop.f32.mrb[0].mxu0
        %v1813 = vadd.f32 %v1661, %v1812
        %v1814 = vpop.f32.mrb[0].mxu0
        %v1815 = vadd.f32 %v1665, %v1814
        %v1816 = vpop.f32.mrb[0].mxu0
        %v1817 = vadd.f32 %v1661, %v1816
        %v1818 = vpop.f32.mrb[0].mxu0
        %v1819 = vadd.f32 %v1665, %v1818
        %1820 = vmatprep.mubr.bf16.mxu0 0
        %1821 = vmatmul.mubr.bf16.gmra.mrb[0].mxu0 %v1636
        %v1822 = vpop.f32.mrb[0].mxu0
        %v1823 = vadd.f32 %v1661, %v1822
        %v1824 = vpop.f32.mrb[0].mxu0
        %v1825 = vadd.f32 %v1665, %v1824
        %v1826 = vpop.f32.mrb[0].mxu0
        %v1827 = vadd.f32 %v1661, %v1826
        %v1828 = vpop.f32.mrb[0].mxu0
        %v1829 = vadd.f32 %v1665, %v1828
        %1830 = vmatprep.mubr.bf16.mxu0 0
        %1831 = vmatmul.mubr.bf16.gmra.mrb[0].mxu0 %v1637
        %v1832 = vpop.f32.mrb[0].mxu0
        %v1833 = vadd.f32 %v1661, %v1832
        %v1834 = vpop.f32.mrb[0].mxu0
        %v1835 = vadd.f32 %v1665, %v1834
        %v1836 = vpop.f32.mrb[0].mxu0
        %v1837 = vadd.f32 %v1661, %v1836
        %v1838 = vpop.f32.mrb[0].mxu0
        %v1839 = vadd.f32 %v1665, %v1838
        %1840 = vmatprep.mubr.bf16.mxu0 0
        %1841 = vmatmul.mubr.bf16.gmra.mrb[0].mxu0 %v1638
        %v1842 = vpop.f32.mrb[0].mxu0
        %v1843 = vadd.f32 %v1661, %v1842
        %v1844 = vpop.f32.mrb[0].mxu0
        %v1845 = vadd.f32 %v1665, %v1844
        %v1846 = vpop.f32.mrb[0].mxu0
        %v1847 = vadd.f32 %v1661, %v1846
        %v1848 = vpop.f32.mrb[0].mxu0
        %v1849 = vadd.f32 %v1665, %v1848
        %1850 = vmatprep.mubr.bf16.mxu0 0
        %1851 = vmatmul.mubr.bf16.gmra.mrb[0].mxu0 %v1639
        %v1852 = vpop.f32.mrb[0].mxu0
        %v1853 = vadd.f32 %v1661, %v1852
        %v1854 = vpop.f32.mrb[0].mxu0
        %v1855 = vadd.f32 %v1665, %v1854
        %v1856 = vpop.f32.mrb[0].mxu0
        %v1857 = vadd.f32 %v1661, %v1856
        %v1858 = vpop.f32.mrb[0].mxu0
        %v1859 = vadd.f32 %v1665, %v1858
        %1860 = vdwg.mxu0
        %1861 = vst [vmem:[%s562] sm:$0xff] %v1783
        %1862 = vst [vmem:[%s562 + $0x8] sm:$0xff] %v1785
        %1863 = vst [vmem:[%s562 + $0x10] sm:$0xff] %v1787
        %1864 = vst [vmem:[%s562 + $0x18] sm:$0xff] %v1789
        %1865 = vst [vmem:[%s562 + $0x20] sm:$0xff] %v1793
        %1866 = vst [vmem:[%s562 + $0x28] sm:$0xff] %v1795
        %1867 = vst [vmem:[%s562 + $0x30] sm:$0xff] %v1797
        %1868 = vst [vmem:[%s562 + $0x38] sm:$0xff] %v1799
        %1869 = vst [vmem:[%s562 + $0x40] sm:$0xff] %v1803
        %1870 = vst [vmem:[%s562 + $0x48] sm:$0xff] %v1805
        %1871 = vst [vmem:[%s562 + $0x50] sm:$0xff] %v1807
        %1872 = vst [vmem:[%s562 + $0x58] sm:$0xff] %v1809
        %1873 = vst [vmem:[%s562 + $0x60] sm:$0xff] %v1813
        %1874 = vst [vmem:[%s562 + $0x68] sm:$0xff] %v1815
        %1875 = vst [vmem:[%s562 + $0x70] sm:$0xff] %v1817
        %1876 = vst [vmem:[%s562 + $0x78] sm:$0xff] %v1819
        %1877 = vst [vmem:[%s562 + $0x80] sm:$0xff] %v1823
        %1878 = vst [vmem:[%s562 + $0x88] sm:$0xff] %v1825
        %1879 = vst [vmem:[%s562 + $0x90] sm:$0xff] %v1827
        %1880 = vst [vmem:[%s562 + $0x98] sm:$0xff] %v1829
        %1881 = vst [vmem:[%s562 + $0xa0] sm:$0xff] %v1833
        %1882 = vst [vmem:[%s562 + $0xa8] sm:$0xff] %v1835
        %1883 = vst [vmem:[%s562 + $0xb0] sm:$0xff] %v1837
        %1884 = vst [vmem:[%s562 + $0xb8] sm:$0xff] %v1839
        %1885 = vst [vmem:[%s562 + $0xc0] sm:$0xff] %v1843
        %1886 = vst [vmem:[%s562 + $0xc8] sm:$0xff] %v1845
        %1887 = vst [vmem:[%s562 + $0xd0] sm:$0xff] %v1847
        %1888 = vst [vmem:[%s562 + $0xd8] sm:$0xff] %v1849
        %1889 = vst [vmem:[%s562 + $0xe0] sm:$0xff] %v1853
        %1890 = vst [vmem:[%s562 + $0xe8] sm:$0xff] %v1855
        %1891 = vst [vmem:[%s562 + $0xf0] sm:$0xff] %v1857
        %1892 = vst [vmem:[%s562 + $0xf8] sm:$0xff] %v1859
        %s1893 = sand.u32 %s324, 1
        %s1894 = scalar_lea.sflag [#allocation4], %s1893
        %s1895 = sand.u32 %s324, 1
        %s1896 = smul.addr %s1895, 128
        %s1897 = scalar_lea.vmem [#allocation13], %s1896
        %s1898 = sand.u32 %s350, 1
        %s1899 = scalar_lea.sflag [#allocation15], %s1898
        %s1900 = sand.u32 %s350, 1
        %s1901 = smul.addr %s1900, 256
        %s1902 = scalar_lea.vmem [#allocation14], %s1901
        // Predicated region
        $region97: #{tpu_custom_call.1} parent=71 // pred_check
          %p1903 = pneg %p334
        $region98: #{tpu_custom_call.1} parent=71 // pred_check_branch
          %1905 = sbr.rel (%p1903) target = $region100
        $region99: #{tpu_custom_call.1} parent=71 // pred_region
          %s1906 = smul.u32 16, %s38
          %s1908 = ssub.s32 2048, 2048
          %1909 = vsyncadd %s1894, %s1908
          %s1910 = smul.addr %s1906, 128
          %s1911 = scalar_lea.hbm %s13, %s1910
          %s1912 = sshll.u32 %s1897, 4
          %s1913 = int_to_ptr.vmem [resolvable:$true] %s1912
          %1918 = dma.vmem_to_hbm [thread:$0]  %s1913, 2048, %s1911, %s1894, 128, 128, 8
        $region100: #{tpu_custom_call.1} parent=71 // pred_fallthru
          _
        // Predicated region
        $region101: #{tpu_custom_call.1} parent=71 // pred_check
          %p1919 = pneg %p360
        $region102: #{tpu_custom_call.1} parent=71 // pred_check_branch
          %1921 = sbr.rel (%p1919) target = $region104
        $region103: #{tpu_custom_call.1} parent=71 // pred_region
          %s1922 = smul.u32 16, %s38
          %s1924 = ssub.s32 4096, 4096
          %1925 = vsyncadd %s1899, %s1924
          %s1926 = smul.addr %s1922, 2
          %s1927 = smul.addr %s1926, 128
          %s1928 = scalar_lea.hbm %s14, %s1927
          %s1929 = sshll.u32 %s1902, 4
          %s1930 = int_to_ptr.vmem [resolvable:$true] %s1929
          %1935 = dma.vmem_to_hbm [thread:$0]  %s1930, 4096, %s1928, %s1899, 256, 256, 16
        $region104: #{tpu_custom_call.1} parent=71 // pred_fallthru
          _
      $region72: #{tpu_custom_call.1} parent=5 // pred_fallthru
        _
      %p1936 = scmp.le.s32.totalorder 2, %s33
      // Predicated region
      $region105: #{tpu_custom_call.1} parent=5 // pred_check
        %p1937 = pneg %p1936
      $region106: #{tpu_custom_call.1} parent=5 // pred_check_branch
        %1939 = sbr.rel (%p1937) target = $region108
      $region107: #{tpu_custom_call.1} parent=5 // pred_region
        %s1940 = ssub.s32 %s33, 2
        // Predicated region
        $region109: #{tpu_custom_call.1} parent=107 // pred_check
          %p1941 = pneg %p340
        $region110: #{tpu_custom_call.1} parent=107 // pred_check_branch
          %1943 = sbr.rel (%p1941) target = $region112
        $region111: #{tpu_custom_call.1} parent=107 // pred_region
          %s1944 = sand.u32 %s325, 1
          %s1945 = scalar_lea.sflag [#allocation4], %s1944
          %s1946 = sand.u32 %s325, 1
          %s1947 = smul.addr %s1946, 128
          %s1948 = scalar_lea.vmem [#allocation13], %s1947
          %1949 = dma.done %s1945, 2048
        $region112: #{tpu_custom_call.1} parent=107 // pred_fallthru
          _
        // Predicated region
        $region113: #{tpu_custom_call.1} parent=107 // pred_check
          %p1950 = pneg %p366
        $region114: #{tpu_custom_call.1} parent=107 // pred_check_branch
          %1952 = sbr.rel (%p1950) target = $region116
        $region115: #{tpu_custom_call.1} parent=107 // pred_region
          %s1953 = sand.u32 %s351, 1
          %s1954 = scalar_lea.sflag [#allocation15], %s1953
          %s1955 = sand.u32 %s351, 1
          %s1956 = smul.addr %s1955, 256
          %s1957 = scalar_lea.vmem [#allocation14], %s1956
          %1958 = dma.done %s1954, 4096
        $region116: #{tpu_custom_call.1} parent=107 // pred_fallthru
          _
      $region108: #{tpu_custom_call.1} parent=5 // pred_fallthru
        _
    $region6: #{tpu_custom_call.1} parent=1 // loop_footer
      %s37 = sadd.s32 1, %s33
    $region7: #{tpu_custom_call.1} parent=1 // loop_footer_branch
      %32 = sbr.rel target = $region3
    $region8: #{tpu_custom_call.1} parent=1 // loop_exit
      _
    %1959 = vsyncpa [#allocation3], 1
    %s1960 = scalar_lea.sflag [#allocation3], 1
    %1961 = vsyncpa %s1960, 1
    %1962 = vsyncpa [#allocation6], 1
    %1963 = vsyncpa [#allocation9], 1
    %1964 = vsyncpa [#allocation12], 1
    %1965 = vsyncpa [#allocation4], 1
    %s1966 = scalar_lea.sflag [#allocation4], 1
    %1967 = vsyncpa %s1966, 1
    %1968 = vsyncpa [#allocation15], 1
    %s1969 = scalar_lea.sflag [#allocation15], 1
    %1970 = vsyncpa %s1969, 1

</llo_original>
